<compile_context>
chip_gen: v5e
topology: v5e:2x2
jax: 0.10.0
libtpu: 0.0.40
codegen_flags: <defaults>
</compile_context>

<pallas_src>
import jax
import jax.numpy as jnp
from jax import lax
from jax.experimental import pallas as pl
from jax.experimental.pallas import tpu as pltpu

LANES = 128  # TPU lane width; logits occupy one lane-dense group of the slab.


def _round_up(x, m):
    return (x + m - 1) // m * m


def multivae_rate_kernel(ids_ref, item_ref,                  # scalar prefetch (SMEM)
                         inv_ref,                            # (TB, 1) f32
                         qtab_ref, ptab_ref,                 # HBM (pl.ANY) tables
                         qw1_ref, qb1_ref, qw2_ref, qb2_ref,
                         pw1_ref, pb1_ref, pw2_ref, pb2_ref,
                         out_ref,                            # (TB, 2E + LANES) f32
                         hist_buf, hi_buf, sems, hu_acc, hi_acc):
    TB, E = hu_acc.shape
    L = hist_buf.shape[1]
    base = pl.program_id(0) * TB

    # --- fused embedding gather: for each batch row, DMA its L history rows
    # plus the target-item row straight from the HBM tables into VMEM,
    # double-buffered over batch rows so DMAs overlap the accumulation. ---
    def issue(b, slot):
        row = base + b
        for l in range(L):                                   # static unroll over history
            pltpu.make_async_copy(
                qtab_ref.at[pl.ds(ids_ref[row * L + l], 1)],
                hist_buf.at[slot, pl.ds(l, 1)],
                sems.at[slot, l]).start()
        pltpu.make_async_copy(
            ptab_ref.at[pl.ds(item_ref[row], 1)],
            hi_buf.at[slot],
            sems.at[slot, L]).start()

    def wait_row(slot):
        for l in range(L):
            pltpu.make_async_copy(
                qtab_ref.at[pl.ds(0, 1)],
                hist_buf.at[slot, pl.ds(l, 1)],
                sems.at[slot, l]).wait()
        pltpu.make_async_copy(
            ptab_ref.at[pl.ds(0, 1)],
            hi_buf.at[slot],
            sems.at[slot, L]).wait()

    issue(0, 0)

    @pl.loop(0, TB)
    def _(b):
        slot = b & 1
        wait_row(slot)

        @pl.when(b + 1 < TB)
        def _():
            issue(b + 1, 1 - slot)

        # Padding ids hit table row 0, which is exactly zero (padding_idx=0),
        # so a plain sum over L reproduces the masked sum -- no mask multiply,
        # no (TB, L, E) f32 intermediate.
        hu_acc[pl.ds(b, 1), :] = jnp.sum(hist_buf[slot], axis=0, keepdims=True)
        hi_acc[pl.ds(b, 1), :] = hi_buf[slot]

    # --- MLPs on the whole batch tile (bf16 MXU inputs, f32 accumulation) ---
    w_dt = qw1_ref.dtype
    hu = hu_acc[...] * inv_ref[...]                          # (TB, E) * (TB, 1)
    h1 = jnp.tanh(jnp.dot(hu.astype(w_dt), qw1_ref[...],
                          preferred_element_type=jnp.float32) + qb1_ref[...])
    mulv = (jnp.dot(h1.astype(w_dt), qw2_ref[...],
                    preferred_element_type=jnp.float32) + qb2_ref[...])    # (TB, 2E)
    mu = mulv[:, :E]
    # Eval-mode reparameterize -> mu.
    p1 = jnp.tanh(jnp.dot(mu.astype(w_dt), pw1_ref[...],
                          preferred_element_type=jnp.float32) + pb1_ref[...])
    hu_out = (jnp.dot(p1.astype(w_dt), pw2_ref[...],
                      preferred_element_type=jnp.float32) + pb2_ref[...])  # (TB, E)

    logits = jnp.sum(hu_out * hi_acc[...], axis=-1, keepdims=True)         # (TB, 1)

    # Single lane-dense output slab: [mu | logvar | logits broadcast x LANES].
    out_ref[:, :2 * E] = mulv
    out_ref[:, 2 * E:] = jnp.broadcast_to(logits, (TB, LANES))


def multivae_rate_forward(params, batch, *, block_b=256):
    """batch = (user, u_ir, nbr, item, rate); returns (logits, mu, logvar)."""
    _, u_ir, _, item, _ = batch
    user_hist = u_ir[:, :, 0].astype(jnp.int32)              # (B, L) item ids
    item_ids = item.astype(jnp.int32)                        # (B,)
    B, L = user_hist.shape
    E = params["qw1"].shape[0]

    # 1/||mask||_2 with F.normalize's 1e-12 clamp; shipped as a tiny (B, 1)
    # stream instead of the full (B, L) mask (masked sum is free because
    # table row 0 is exactly zero).
    count = jnp.sum((user_hist != 0).astype(jnp.float32), axis=-1, keepdims=True)
    inv = 1.0 / jnp.maximum(jnp.sqrt(count), 1e-12)          # (B, 1)

    # --- generation-aware batch tile ---
    try:
        vmem_cap = int(pltpu.get_tpu_info().vmem_capacity_bytes)
    except Exception:                                        # conservative: v7x size
        vmem_cap = 64 * 1024 * 1024
    budget = int(0.45 * vmem_cap)
    out_w = 2 * E + LANES

    def vmem_bytes(tb):
        pipelined = 2 * tb * LANES * 4 + 2 * tb * out_w * 4        # inv + out (dbl buf)
        weights = 2 * (5 * E * E * 2 + 5 * E * 4)                  # bf16 W, f32 b (dbl buf)
        scratch = 2 * L * E * 4 + 2 * E * 4 + 2 * tb * E * 4       # gather bufs + accs
        return pipelined + weights + scratch

    TB = max(8, _round_up(min(block_b, B), 8))
    if B >= 16:                                # >= 2 grid steps: feeds both v7x TCs
        TB = min(TB, _round_up(pl.cdiv(B, 2), 8))
    while TB > 8 and vmem_bytes(TB) > budget:
        TB -= 8
    Bp = _round_up(B, TB)
    if Bp != B:
        pad = Bp - B
        user_hist = jnp.pad(user_hist, ((0, pad), (0, 0)))   # padded ids -> zero row 0
        item_ids = jnp.pad(item_ids, ((0, pad),))
        inv = jnp.pad(inv, ((0, pad), (0, 0)))
    grid = (Bp // TB,)
    ids_flat = user_hist.reshape(-1)                         # 1-D: minimal SMEM padding

    vmem_limit = int(min(budget, max(2 * vmem_bytes(TB) + (4 << 20), 16 << 20)))

    cost = pl.CostEstimate(
        flops=int(2 * Bp * (L * E + 5 * E * E + E)),
        transcendentals=int(2 * Bp * E),
        bytes_accessed=int(Bp * (L + 1) * E * 4 + Bp * L * 4 + 2 * Bp * 4
                           + 5 * E * E * 2 + 5 * E * 4 + Bp * out_w * 4),
    )

    # Resident weights: constant block index -> fetched once, stay in VMEM.
    # TODO(synk): pipeline_mode=pl.Buffered(1) on these specs would drop their
    # second pipeline buffer; only material at E >= 1024.
    res = lambda shape: pl.BlockSpec(shape, lambda i, ids, it: (0, 0))

    out = pl.pallas_call(
        multivae_rate_kernel,
        out_shape=jax.ShapeDtypeStruct((Bp, out_w), jnp.float32),
        grid_spec=pltpu.PrefetchScalarGridSpec(
            num_scalar_prefetch=2,
            grid=grid,
            in_specs=[
                pl.BlockSpec((TB, 1), lambda i, ids, it: (i, 0)),   # 1/sqrt(count)
                pl.BlockSpec(memory_space=pl.ANY),                  # q_item_embs (HBM)
                pl.BlockSpec(memory_space=pl.ANY),                  # p_item_embs (HBM)
                res((E, E)), res((1, E)),                           # q_lin1
                res((E, 2 * E)), res((1, 2 * E)),                   # q_lin2 (mu||logvar)
                res((E, E)), res((1, E)),                           # p_lin1
                res((E, E)), res((1, E)),                           # p_lin2
            ],
            out_specs=pl.BlockSpec((TB, out_w), lambda i, ids, it: (i, 0)),
            scratch_shapes=[
                pltpu.VMEM((2, L, E), jnp.float32),                 # history gather buf
                pltpu.VMEM((2, 1, E), jnp.float32),                 # target-item buf
                pltpu.SemaphoreType.DMA((2, L + 1)),
                pltpu.VMEM((TB, E), jnp.float32),                   # hu accumulator
                pltpu.VMEM((TB, E), jnp.float32),                   # gathered hi rows
            ],
        ),
        compiler_params=pltpu.CompilerParams(
            dimension_semantics=("parallel",),
            vmem_limit_bytes=vmem_limit),
        cost_estimate=cost,
    )(ids_flat, item_ids, inv,
      params["q_item_embs"], params["p_item_embs"],
      params["qw1"], params["qb1"], params["qw2"], params["qb2"],
      params["pw1"], params["pb1"], params["pw2"], params["pb2"])

    logits = out[:B, 2 * E]
    mu = out[:B, :E]
    logvar = out[:B, E:2 * E]
    return logits, mu, logvar


def init_params(key, item_num, edim):
    ks = jax.random.split(key, 6)
    bound_e = 0.5 / item_num
    q_emb = jax.random.uniform(ks[0], (item_num, edim), jnp.float32, -bound_e, bound_e)
    p_emb = jax.random.uniform(ks[1], (item_num, edim), jnp.float32, -bound_e, bound_e)
    # padding_idx=0: row 0 exactly zero (the kernel's mask-free history sum
    # relies on this, matching nn.Embedding(padding_idx=0)).
    # TODO(synk): at E >= 256, store the tables as bf16 row-pairs to halve the
    # per-row gather bytes; kept f32 here so single-row DMAs are sublane-aligned.
    q_emb = q_emb.at[0].set(0.0)
    p_emb = p_emb.at[0].set(0.0)

    def linear(k, fan_in, fan_out):
        kw, kb = jax.random.split(k)
        bound = 1.0 / (fan_in ** 0.5)
        # Weight matrices in bf16 (native MXU dtype); biases stay f32 (tiny).
        W = jax.random.uniform(kw, (fan_in, fan_out), jnp.float32, -bound, bound)
        b = jax.random.uniform(kb, (1, fan_out), jnp.float32, -bound, bound)
        return W.astype(jnp.bfloat16), b

    qw1, qb1 = linear(ks[2], edim, edim)
    qw2, qb2 = linear(ks[3], edim, 2 * edim)   # chunk(2, dim=-1) == column split
    pw1, pb1 = linear(ks[4], edim, edim)
    pw2, pb2 = linear(ks[5], edim, edim)

    return dict(q_item_embs=q_emb, p_item_embs=p_emb,
                qw1=qw1, qb1=qb1, qw2=qw2, qb2=qb2,
                pw1=pw1, pb1=pb1, pw2=pw2, pb2=pb2)


def reference_forward(params, batch):
    """Pure-JAX f32 reference matching the PyTorch eval-mode forward."""
    _, u_ir, _, item, _ = batch
    user_hist = u_ir[:, :, 0]
    hist_emb = params["q_item_embs"][user_hist].astype(jnp.float32)
    mask = (user_hist != 0).astype(jnp.float32)
    norm = jnp.sqrt(jnp.sum(mask * mask, axis=-1, keepdims=True))
    nmask = mask / jnp.maximum(norm, 1e-12)
    hu = jnp.sum(hist_emb * nmask[:, :, None], axis=1)
    w = lambda n: params[n].astype(jnp.float32)
    h1 = jnp.tanh(hu @ w("qw1") + w("qb1"))
    mulv = h1 @ w("qw2") + w("qb2")
    E = params["qw1"].shape[0]
    mu, logvar = mulv[:, :E], mulv[:, E:]
    p1 = jnp.tanh(mu @ w("pw1") + w("pb1"))
    hu_out = p1 @ w("pw2") + w("pb2")
    hi = params["p_item_embs"][item].astype(jnp.float32)
    logits = jnp.sum(hu_out * hi, axis=-1)
    return logits, mu, logvar


if __name__ == "__main__":
    key = jax.random.PRNGKey(0)
    k_params, k_hist, k_item = jax.random.split(key, 3)

    user_num, item_num, edim = 16, 50, 128   # edim multiple of 128 -> lane-dense tiles
    B, L = 64, 8

    params = init_params(k_params, item_num, edim)

    # batch = (user, u_ir, nbr, item, rate); only u_ir[:, :, 0] and item are used.
    user = jnp.arange(B, dtype=jnp.int32)
    u_ir = jax.random.randint(k_hist, (B, L, 2), 0, item_num, dtype=jnp.int32)
    nbr = jnp.zeros((B, 4), dtype=jnp.int32)
    item = jax.random.randint(k_item, (B,), 1, item_num, dtype=jnp.int32)
    rate = jnp.ones((B,), dtype=jnp.float32)
    batch = (user, u_ir, nbr, item, rate)

    # block_b=16 -> grid=(4,): exercises the pipelined tiling + megacore sharding.
    logits, mu, logvar = multivae_rate_forward(params, batch, block_b=16)
    jax.block_until_ready((logits, mu, logvar))

    ref_logits, ref_mu, ref_logvar = reference_forward(params, batch)
    # bf16 MXU activation rounding vs the pure-f32 reference -> ~1e-4 drift.
    assert jnp.allclose(logits, ref_logits, atol=2e-3), float(jnp.max(jnp.abs(logits - ref_logits)))
    assert jnp.allclose(mu, ref_mu, atol=2e-3), float(jnp.max(jnp.abs(mu - ref_mu)))
    assert jnp.allclose(logvar, ref_logvar, atol=2e-3), float(jnp.max(jnp.abs(logvar - ref_logvar)))

    print("KERNEL_OK")
</pallas_src>

<mosaic_0001>
module attributes {stable_mosaic.version = 11 : i64} {
  func.func @multivae_rate_kernel(%arg0: i32, %arg1: memref<512xi32, #tpu.memory_space<smem>>, %arg2: memref<64xi32, #tpu.memory_space<smem>>, %arg3: memref<16x1xf32, #tpu.memory_space<vmem>>, %arg4: memref<50x128xf32, #tpu.memory_space<any>>, %arg5: memref<50x128xf32, #tpu.memory_space<any>>, %arg6: memref<128x128xbf16, #tpu.memory_space<vmem>>, %arg7: memref<1x128xf32, #tpu.memory_space<vmem>>, %arg8: memref<128x256xbf16, #tpu.memory_space<vmem>>, %arg9: memref<1x256xf32, #tpu.memory_space<vmem>>, %arg10: memref<128x128xbf16, #tpu.memory_space<vmem>>, %arg11: memref<1x128xf32, #tpu.memory_space<vmem>>, %arg12: memref<128x128xbf16, #tpu.memory_space<vmem>>, %arg13: memref<1x128xf32, #tpu.memory_space<vmem>>, %arg14: memref<16x384xf32, #tpu.memory_space<vmem>>, %arg15: memref<2x8x128xf32, #tpu.memory_space<vmem>>, %arg16: memref<2x1x128xf32, #tpu.memory_space<vmem>>, %arg17: memref<2x9x!tpu.dma_semaphore, #tpu.memory_space<semaphore_mem>>, %arg18: memref<16x128xf32, #tpu.memory_space<vmem>>, %arg19: memref<16x128xf32, #tpu.memory_space<vmem>>) attributes {dimension_semantics = [#tpu.dimension_semantics<parallel>], iteration_bounds = array<i64: 4>, scalar_prefetch = 2 : i64, scratch_operands = 5 : i64, tpu.core_type = #tpu.core_type<tc>, window_params = [{transform_indices = @transform_0, window_bounds = array<i64: 16, 1>}, {}, {}, {pipeline_mode = #tpu.pipeline_mode<synchronous>, transform_indices = @transform_3, window_bounds = array<i64: 128, 128>}, {pipeline_mode = #tpu.pipeline_mode<synchronous>, transform_indices = @transform_4, window_bounds = array<i64: 1, 128>}, {pipeline_mode = #tpu.pipeline_mode<synchronous>, transform_indices = @transform_5, window_bounds = array<i64: 128, 256>}, {pipeline_mode = #tpu.pipeline_mode<synchronous>, transform_indices = @transform_6, window_bounds = array<i64: 1, 256>}, {pipeline_mode = #tpu.pipeline_mode<synchronous>, transform_indices = @transform_7, window_bounds = array<i64: 128, 128>}, {pipeline_mode = #tpu.pipeline_mode<synchronous>, transform_indices = @transform_8, window_bounds = array<i64: 1, 128>}, {pipeline_mode = #tpu.pipeline_mode<synchronous>, transform_indices = @transform_9, window_bounds = array<i64: 128, 128>}, {pipeline_mode = #tpu.pipeline_mode<synchronous>, transform_indices = @transform_10, window_bounds = array<i64: 1, 128>}, {transform_indices = @transform_11, window_bounds = array<i64: 16, 384>}]} {
    %c16_i32 = arith.constant 16 : i32
    %0 = arith.muli %arg0, %c16_i32 : i32
    %c0_i32 = arith.constant 0 : i32
    %1 = arith.addi %0, %c0_i32 : i32
    %c8_i32 = arith.constant 8 : i32
    %2 = arith.muli %1, %c8_i32 : i32
    %c0_i32_0 = arith.constant 0 : i32
    %3 = arith.addi %2, %c0_i32_0 : i32
    %4 = arith.index_cast %3 : i32 to index
    %5 = memref.load %arg1[%4] : memref<512xi32, #tpu.memory_space<smem>>
    %c0_i32_1 = arith.constant 0 : i32
    %c0_i32_2 = arith.constant 0 : i32
    %c0_i32_3 = arith.constant 0 : i32
    %c0_i32_4 = arith.constant 0 : i32
    %6 = tpu.memref_slice %arg4[%5, %c0_i32_4] : memref<50x128xf32, #tpu.memory_space<any>> -> memref<1x128xf32, #tpu.memory_space<any>>
    %c0_i32_5 = arith.constant 0 : i32
    %c0_i32_6 = arith.constant 0 : i32
    %7 = tpu.memref_slice %arg15[%c0_i32_1, %c0_i32_5, %c0_i32_6] : memref<2x8x128xf32, #tpu.memory_space<vmem>> -> memref<1x1x128xf32, #tpu.memory_space<vmem>>
    %8 = tpu.memref_squeeze %7 : memref<1x1x128xf32, #tpu.memory_space<vmem>> -> memref<1x128xf32, #tpu.memory_space<vmem>>
    %9 = tpu.memref_slice %arg17[%c0_i32_2, %c0_i32_3] : memref<2x9x!tpu.dma_semaphore, #tpu.memory_space<semaphore_mem>> -> memref<1x1x!tpu.dma_semaphore, #tpu.memory_space<semaphore_mem>>
    %10 = tpu.memref_squeeze %9 : memref<1x1x!tpu.dma_semaphore, #tpu.memory_space<semaphore_mem>> -> memref<!tpu.dma_semaphore, #tpu.memory_space<semaphore_mem>>
    tpu.enqueue_dma source(%6 : memref<1x128xf32, #tpu.memory_space<any>>) target(%8 : memref<1x128xf32, #tpu.memory_space<vmem>>) target_semaphore(%10 : memref<!tpu.dma_semaphore, #tpu.memory_space<semaphore_mem>>)
    %c8_i32_7 = arith.constant 8 : i32
    %11 = arith.muli %1, %c8_i32_7 : i32
    %c1_i32 = arith.constant 1 : i32
    %12 = arith.addi %11, %c1_i32 : i32
    %13 = arith.index_cast %12 : i32 to index
    %14 = memref.load %arg1[%13] : memref<512xi32, #tpu.memory_space<smem>>
    %c0_i32_8 = arith.constant 0 : i32
    %c0_i32_9 = arith.constant 0 : i32
    %c1_i32_10 = arith.constant 1 : i32
    %c0_i32_11 = arith.constant 0 : i32
    %15 = tpu.memref_slice %arg4[%14, %c0_i32_11] : memref<50x128xf32, #tpu.memory_space<any>> -> memref<1x128xf32, #tpu.memory_space<any>>
    %c1_i32_12 = arith.constant 1 : i32
    %c0_i32_13 = arith.constant 0 : i32
    %16 = tpu.memref_slice %arg15[%c0_i32_8, %c1_i32_12, %c0_i32_13] : memref<2x8x128xf32, #tpu.memory_space<vmem>> -> memref<1x1x128xf32, #tpu.memory_space<vmem>>
    %17 = tpu.memref_squeeze %16 : memref<1x1x128xf32, #tpu.memory_space<vmem>> -> memref<1x128xf32, #tpu.memory_space<vmem>>
    %18 = tpu.memref_slice %arg17[%c0_i32_9, %c1_i32_10] : memref<2x9x!tpu.dma_semaphore, #tpu.memory_space<semaphore_mem>> -> memref<1x1x!tpu.dma_semaphore, #tpu.memory_space<semaphore_mem>>
    %19 = tpu.memref_squeeze %18 : memref<1x1x!tpu.dma_semaphore, #tpu.memory_space<semaphore_mem>> -> memref<!tpu.dma_semaphore, #tpu.memory_space<semaphore_mem>>
    tpu.enqueue_dma source(%15 : memref<1x128xf32, #tpu.memory_space<any>>) target(%17 : memref<1x128xf32, #tpu.memory_space<vmem>>) target_semaphore(%19 : memref<!tpu.dma_semaphore, #tpu.memory_space<semaphore_mem>>)
    %c8_i32_14 = arith.constant 8 : i32
    %20 = arith.muli %1, %c8_i32_14 : i32
    %c2_i32 = arith.constant 2 : i32
    %21 = arith.addi %20, %c2_i32 : i32
    %22 = arith.index_cast %21 : i32 to index
    %23 = memref.load %arg1[%22] : memref<512xi32, #tpu.memory_space<smem>>
    %c0_i32_15 = arith.constant 0 : i32
    %c0_i32_16 = arith.constant 0 : i32
    %c2_i32_17 = arith.constant 2 : i32
    %c0_i32_18 = arith.constant 0 : i32
    %24 = tpu.memref_slice %arg4[%23, %c0_i32_18] : memref<50x128xf32, #tpu.memory_space<any>> -> memref<1x128xf32, #tpu.memory_space<any>>
    %c2_i32_19 = arith.constant 2 : i32
    %c0_i32_20 = arith.constant 0 : i32
    %25 = tpu.memref_slice %arg15[%c0_i32_15, %c2_i32_19, %c0_i32_20] : memref<2x8x128xf32, #tpu.memory_space<vmem>> -> memref<1x1x128xf32, #tpu.memory_space<vmem>>
    %26 = tpu.memref_squeeze %25 : memref<1x1x128xf32, #tpu.memory_space<vmem>> -> memref<1x128xf32, #tpu.memory_space<vmem>>
    %27 = tpu.memref_slice %arg17[%c0_i32_16, %c2_i32_17] : memref<2x9x!tpu.dma_semaphore, #tpu.memory_space<semaphore_mem>> -> memref<1x1x!tpu.dma_semaphore, #tpu.memory_space<semaphore_mem>>
    %28 = tpu.memref_squeeze %27 : memref<1x1x!tpu.dma_semaphore, #tpu.memory_space<semaphore_mem>> -> memref<!tpu.dma_semaphore, #tpu.memory_space<semaphore_mem>>
    tpu.enqueue_dma source(%24 : memref<1x128xf32, #tpu.memory_space<any>>) target(%26 : memref<1x128xf32, #tpu.memory_space<vmem>>) target_semaphore(%28 : memref<!tpu.dma_semaphore, #tpu.memory_space<semaphore_mem>>)
    %c8_i32_21 = arith.constant 8 : i32
    %29 = arith.muli %1, %c8_i32_21 : i32
    %c3_i32 = arith.constant 3 : i32
    %30 = arith.addi %29, %c3_i32 : i32
    %31 = arith.index_cast %30 : i32 to index
    %32 = memref.load %arg1[%31] : memref<512xi32, #tpu.memory_space<smem>>
    %c0_i32_22 = arith.constant 0 : i32
    %c0_i32_23 = arith.constant 0 : i32
    %c3_i32_24 = arith.constant 3 : i32
    %c0_i32_25 = arith.constant 0 : i32
    %33 = tpu.memref_slice %arg4[%32, %c0_i32_25] : memref<50x128xf32, #tpu.memory_space<any>> -> memref<1x128xf32, #tpu.memory_space<any>>
    %c3_i32_26 = arith.constant 3 : i32
    %c0_i32_27 = arith.constant 0 : i32
    %34 = tpu.memref_slice %arg15[%c0_i32_22, %c3_i32_26, %c0_i32_27] : memref<2x8x128xf32, #tpu.memory_space<vmem>> -> memref<1x1x128xf32, #tpu.memory_space<vmem>>
    %35 = tpu.memref_squeeze %34 : memref<1x1x128xf32, #tpu.memory_space<vmem>> -> memref<1x128xf32, #tpu.memory_space<vmem>>
    %36 = tpu.memref_slice %arg17[%c0_i32_23, %c3_i32_24] : memref<2x9x!tpu.dma_semaphore, #tpu.memory_space<semaphore_mem>> -> memref<1x1x!tpu.dma_semaphore, #tpu.memory_space<semaphore_mem>>
    %37 = tpu.memref_squeeze %36 : memref<1x1x!tpu.dma_semaphore, #tpu.memory_space<semaphore_mem>> -> memref<!tpu.dma_semaphore, #tpu.memory_space<semaphore_mem>>
    tpu.enqueue_dma source(%33 : memref<1x128xf32, #tpu.memory_space<any>>) target(%35 : memref<1x128xf32, #tpu.memory_space<vmem>>) target_semaphore(%37 : memref<!tpu.dma_semaphore, #tpu.memory_space<semaphore_mem>>)
    %c8_i32_28 = arith.constant 8 : i32
    %38 = arith.muli %1, %c8_i32_28 : i32
    %c4_i32 = arith.constant 4 : i32
    %39 = arith.addi %38, %c4_i32 : i32
    %40 = arith.index_cast %39 : i32 to index
    %41 = memref.load %arg1[%40] : memref<512xi32, #tpu.memory_space<smem>>
    %c0_i32_29 = arith.constant 0 : i32
    %c0_i32_30 = arith.constant 0 : i32
    %c4_i32_31 = arith.constant 4 : i32
    %c0_i32_32 = arith.constant 0 : i32
    %42 = tpu.memref_slice %arg4[%41, %c0_i32_32] : memref<50x128xf32, #tpu.memory_space<any>> -> memref<1x128xf32, #tpu.memory_space<any>>
    %c4_i32_33 = arith.constant 4 : i32
    %c0_i32_34 = arith.constant 0 : i32
    %43 = tpu.memref_slice %arg15[%c0_i32_29, %c4_i32_33, %c0_i32_34] : memref<2x8x128xf32, #tpu.memory_space<vmem>> -> memref<1x1x128xf32, #tpu.memory_space<vmem>>
    %44 = tpu.memref_squeeze %43 : memref<1x1x128xf32, #tpu.memory_space<vmem>> -> memref<1x128xf32, #tpu.memory_space<vmem>>
    %45 = tpu.memref_slice %arg17[%c0_i32_30, %c4_i32_31] : memref<2x9x!tpu.dma_semaphore, #tpu.memory_space<semaphore_mem>> -> memref<1x1x!tpu.dma_semaphore, #tpu.memory_space<semaphore_mem>>
    %46 = tpu.memref_squeeze %45 : memref<1x1x!tpu.dma_semaphore, #tpu.memory_space<semaphore_mem>> -> memref<!tpu.dma_semaphore, #tpu.memory_space<semaphore_mem>>
    tpu.enqueue_dma source(%42 : memref<1x128xf32, #tpu.memory_space<any>>) target(%44 : memref<1x128xf32, #tpu.memory_space<vmem>>) target_semaphore(%46 : memref<!tpu.dma_semaphore, #tpu.memory_space<semaphore_mem>>)
    %c8_i32_35 = arith.constant 8 : i32
    %47 = arith.muli %1, %c8_i32_35 : i32
    %c5_i32 = arith.constant 5 : i32
    %48 = arith.addi %47, %c5_i32 : i32
    %49 = arith.index_cast %48 : i32 to index
    %50 = memref.load %arg1[%49] : memref<512xi32, #tpu.memory_space<smem>>
    %c0_i32_36 = arith.constant 0 : i32
    %c0_i32_37 = arith.constant 0 : i32
    %c5_i32_38 = arith.constant 5 : i32
    %c0_i32_39 = arith.constant 0 : i32
    %51 = tpu.memref_slice %arg4[%50, %c0_i32_39] : memref<50x128xf32, #tpu.memory_space<any>> -> memref<1x128xf32, #tpu.memory_space<any>>
    %c5_i32_40 = arith.constant 5 : i32
    %c0_i32_41 = arith.constant 0 : i32
    %52 = tpu.memref_slice %arg15[%c0_i32_36, %c5_i32_40, %c0_i32_41] : memref<2x8x128xf32, #tpu.memory_space<vmem>> -> memref<1x1x128xf32, #tpu.memory_space<vmem>>
    %53 = tpu.memref_squeeze %52 : memref<1x1x128xf32, #tpu.memory_space<vmem>> -> memref<1x128xf32, #tpu.memory_space<vmem>>
    %54 = tpu.memref_slice %arg17[%c0_i32_37, %c5_i32_38] : memref<2x9x!tpu.dma_semaphore, #tpu.memory_space<semaphore_mem>> -> memref<1x1x!tpu.dma_semaphore, #tpu.memory_space<semaphore_mem>>
    %55 = tpu.memref_squeeze %54 : memref<1x1x!tpu.dma_semaphore, #tpu.memory_space<semaphore_mem>> -> memref<!tpu.dma_semaphore, #tpu.memory_space<semaphore_mem>>
    tpu.enqueue_dma source(%51 : memref<1x128xf32, #tpu.memory_space<any>>) target(%53 : memref<1x128xf32, #tpu.memory_space<vmem>>) target_semaphore(%55 : memref<!tpu.dma_semaphore, #tpu.memory_space<semaphore_mem>>)
    %c8_i32_42 = arith.constant 8 : i32
    %56 = arith.muli %1, %c8_i32_42 : i32
    %c6_i32 = arith.constant 6 : i32
    %57 = arith.addi %56, %c6_i32 : i32
    %58 = arith.index_cast %57 : i32 to index
    %59 = memref.load %arg1[%58] : memref<512xi32, #tpu.memory_space<smem>>
    %c0_i32_43 = arith.constant 0 : i32
    %c0_i32_44 = arith.constant 0 : i32
    %c6_i32_45 = arith.constant 6 : i32
    %c0_i32_46 = arith.constant 0 : i32
    %60 = tpu.memref_slice %arg4[%59, %c0_i32_46] : memref<50x128xf32, #tpu.memory_space<any>> -> memref<1x128xf32, #tpu.memory_space<any>>
    %c6_i32_47 = arith.constant 6 : i32
    %c0_i32_48 = arith.constant 0 : i32
    %61 = tpu.memref_slice %arg15[%c0_i32_43, %c6_i32_47, %c0_i32_48] : memref<2x8x128xf32, #tpu.memory_space<vmem>> -> memref<1x1x128xf32, #tpu.memory_space<vmem>>
    %62 = tpu.memref_squeeze %61 : memref<1x1x128xf32, #tpu.memory_space<vmem>> -> memref<1x128xf32, #tpu.memory_space<vmem>>
    %63 = tpu.memref_slice %arg17[%c0_i32_44, %c6_i32_45] : memref<2x9x!tpu.dma_semaphore, #tpu.memory_space<semaphore_mem>> -> memref<1x1x!tpu.dma_semaphore, #tpu.memory_space<semaphore_mem>>
    %64 = tpu.memref_squeeze %63 : memref<1x1x!tpu.dma_semaphore, #tpu.memory_space<semaphore_mem>> -> memref<!tpu.dma_semaphore, #tpu.memory_space<semaphore_mem>>
    tpu.enqueue_dma source(%60 : memref<1x128xf32, #tpu.memory_space<any>>) target(%62 : memref<1x128xf32, #tpu.memory_space<vmem>>) target_semaphore(%64 : memref<!tpu.dma_semaphore, #tpu.memory_space<semaphore_mem>>)
    %c8_i32_49 = arith.constant 8 : i32
    %65 = arith.muli %1, %c8_i32_49 : i32
    %c7_i32 = arith.constant 7 : i32
    %66 = arith.addi %65, %c7_i32 : i32
    %67 = arith.index_cast %66 : i32 to index
    %68 = memref.load %arg1[%67] : memref<512xi32, #tpu.memory_space<smem>>
    %c0_i32_50 = arith.constant 0 : i32
    %c0_i32_51 = arith.constant 0 : i32
    %c7_i32_52 = arith.constant 7 : i32
    %c0_i32_53 = arith.constant 0 : i32
    %69 = tpu.memref_slice %arg4[%68, %c0_i32_53] : memref<50x128xf32, #tpu.memory_space<any>> -> memref<1x128xf32, #tpu.memory_space<any>>
    %c7_i32_54 = arith.constant 7 : i32
    %c0_i32_55 = arith.constant 0 : i32
    %70 = tpu.memref_slice %arg15[%c0_i32_50, %c7_i32_54, %c0_i32_55] : memref<2x8x128xf32, #tpu.memory_space<vmem>> -> memref<1x1x128xf32, #tpu.memory_space<vmem>>
    %71 = tpu.memref_squeeze %70 : memref<1x1x128xf32, #tpu.memory_space<vmem>> -> memref<1x128xf32, #tpu.memory_space<vmem>>
    %72 = tpu.memref_slice %arg17[%c0_i32_51, %c7_i32_52] : memref<2x9x!tpu.dma_semaphore, #tpu.memory_space<semaphore_mem>> -> memref<1x1x!tpu.dma_semaphore, #tpu.memory_space<semaphore_mem>>
    %73 = tpu.memref_squeeze %72 : memref<1x1x!tpu.dma_semaphore, #tpu.memory_space<semaphore_mem>> -> memref<!tpu.dma_semaphore, #tpu.memory_space<semaphore_mem>>
    tpu.enqueue_dma source(%69 : memref<1x128xf32, #tpu.memory_space<any>>) target(%71 : memref<1x128xf32, #tpu.memory_space<vmem>>) target_semaphore(%73 : memref<!tpu.dma_semaphore, #tpu.memory_space<semaphore_mem>>)
    %74 = arith.index_cast %1 : i32 to index
    %75 = memref.load %arg2[%74] : memref<64xi32, #tpu.memory_space<smem>>
    %c0_i32_56 = arith.constant 0 : i32
    %c0_i32_57 = arith.constant 0 : i32
    %c8_i32_58 = arith.constant 8 : i32
    %c0_i32_59 = arith.constant 0 : i32
    %76 = tpu.memref_slice %arg5[%75, %c0_i32_59] : memref<50x128xf32, #tpu.memory_space<any>> -> memref<1x128xf32, #tpu.memory_space<any>>
    %c0_i32_60 = arith.constant 0 : i32
    %c0_i32_61 = arith.constant 0 : i32
    %77 = tpu.memref_slice %arg16[%c0_i32_56, %c0_i32_60, %c0_i32_61] : memref<2x1x128xf32, #tpu.memory_space<vmem>> -> memref<1x1x128xf32, #tpu.memory_space<vmem>>
    %78 = tpu.memref_squeeze %77 : memref<1x1x128xf32, #tpu.memory_space<vmem>> -> memref<1x128xf32, #tpu.memory_space<vmem>>
    %79 = tpu.memref_slice %arg17[%c0_i32_57, %c8_i32_58] : memref<2x9x!tpu.dma_semaphore, #tpu.memory_space<semaphore_mem>> -> memref<1x1x!tpu.dma_semaphore, #tpu.memory_space<semaphore_mem>>
    %80 = tpu.memref_squeeze %79 : memref<1x1x!tpu.dma_semaphore, #tpu.memory_space<semaphore_mem>> -> memref<!tpu.dma_semaphore, #tpu.memory_space<semaphore_mem>>
    tpu.enqueue_dma source(%76 : memref<1x128xf32, #tpu.memory_space<any>>) target(%78 : memref<1x128xf32, #tpu.memory_space<vmem>>) target_semaphore(%80 : memref<!tpu.dma_semaphore, #tpu.memory_space<semaphore_mem>>)
    %c0_i32_62 = arith.constant 0 : i32
    %c16_i32_63 = arith.constant 16 : i32
    %81 = arith.addi %c0_i32_62, %c16_i32_63 : i32
    %c1_i32_64 = arith.constant 1 : i32
    scf.for %arg20 = %c0_i32_62 to %81 step %c1_i32_64  : i32 {
      %c1_i32_94 = arith.constant 1 : i32
      %121 = arith.muli %arg20, %c1_i32_94 : i32
      %c0_i32_95 = arith.constant 0 : i32
      %122 = arith.addi %c0_i32_95, %121 : i32
      %c1_i32_96 = arith.constant 1 : i32
      %123 = arith.andi %122, %c1_i32_96 : i32
      %c0_i32_97 = arith.constant 0 : i32
      %c0_i32_98 = arith.constant 0 : i32
      %c0_i32_99 = arith.constant 0 : i32
      %124 = tpu.memref_slice %arg4[%c0_i32_98, %c0_i32_99] : memref<50x128xf32, #tpu.memory_space<any>> -> memref<1x128xf32, #tpu.memory_space<any>>
      %c0_i32_100 = arith.constant 0 : i32
      %c0_i32_101 = arith.constant 0 : i32
      %125 = tpu.memref_slice %arg15[%123, %c0_i32_100, %c0_i32_101] : memref<2x8x128xf32, #tpu.memory_space<vmem>> -> memref<1x1x128xf32, #tpu.memory_space<vmem>>
      %126 = tpu.memref_squeeze %125 : memref<1x1x128xf32, #tpu.memory_space<vmem>> -> memref<1x128xf32, #tpu.memory_space<vmem>>
      %127 = tpu.memref_slice %arg17[%123, %c0_i32_97] : memref<2x9x!tpu.dma_semaphore, #tpu.memory_space<semaphore_mem>> -> memref<1x1x!tpu.dma_semaphore, #tpu.memory_space<semaphore_mem>>
      %128 = tpu.memref_squeeze %127 : memref<1x1x!tpu.dma_semaphore, #tpu.memory_space<semaphore_mem>> -> memref<!tpu.dma_semaphore, #tpu.memory_space<semaphore_mem>>
      tpu.wait_dma2 semaphore(%128 : memref<!tpu.dma_semaphore, #tpu.memory_space<semaphore_mem>>) src(%124 : memref<1x128xf32, #tpu.memory_space<any>>) dst(%126 : memref<1x128xf32, #tpu.memory_space<vmem>>)
      %c1_i32_102 = arith.constant 1 : i32
      %c0_i32_103 = arith.constant 0 : i32
      %c0_i32_104 = arith.constant 0 : i32
      %129 = tpu.memref_slice %arg4[%c0_i32_103, %c0_i32_104] : memref<50x128xf32, #tpu.memory_space<any>> -> memref<1x128xf32, #tpu.memory_space<any>>
      %c1_i32_105 = arith.constant 1 : i32
      %c0_i32_106 = arith.constant 0 : i32
      %130 = tpu.memref_slice %arg15[%123, %c1_i32_105, %c0_i32_106] : memref<2x8x128xf32, #tpu.memory_space<vmem>> -> memref<1x1x128xf32, #tpu.memory_space<vmem>>
      %131 = tpu.memref_squeeze %130 : memref<1x1x128xf32, #tpu.memory_space<vmem>> -> memref<1x128xf32, #tpu.memory_space<vmem>>
      %132 = tpu.memref_slice %arg17[%123, %c1_i32_102] : memref<2x9x!tpu.dma_semaphore, #tpu.memory_space<semaphore_mem>> -> memref<1x1x!tpu.dma_semaphore, #tpu.memory_space<semaphore_mem>>
      %133 = tpu.memref_squeeze %132 : memref<1x1x!tpu.dma_semaphore, #tpu.memory_space<semaphore_mem>> -> memref<!tpu.dma_semaphore, #tpu.memory_space<semaphore_mem>>
      tpu.wait_dma2 semaphore(%133 : memref<!tpu.dma_semaphore, #tpu.memory_space<semaphore_mem>>) src(%129 : memref<1x128xf32, #tpu.memory_space<any>>) dst(%131 : memref<1x128xf32, #tpu.memory_space<vmem>>)
      %c2_i32_107 = arith.constant 2 : i32
      %c0_i32_108 = arith.constant 0 : i32
      %c0_i32_109 = arith.constant 0 : i32
      %134 = tpu.memref_slice %arg4[%c0_i32_108, %c0_i32_109] : memref<50x128xf32, #tpu.memory_space<any>> -> memref<1x128xf32, #tpu.memory_space<any>>
      %c2_i32_110 = arith.constant 2 : i32
      %c0_i32_111 = arith.constant 0 : i32
      %135 = tpu.memref_slice %arg15[%123, %c2_i32_110, %c0_i32_111] : memref<2x8x128xf32, #tpu.memory_space<vmem>> -> memref<1x1x128xf32, #tpu.memory_space<vmem>>
      %136 = tpu.memref_squeeze %135 : memref<1x1x128xf32, #tpu.memory_space<vmem>> -> memref<1x128xf32, #tpu.memory_space<vmem>>
      %137 = tpu.memref_slice %arg17[%123, %c2_i32_107] : memref<2x9x!tpu.dma_semaphore, #tpu.memory_space<semaphore_mem>> -> memref<1x1x!tpu.dma_semaphore, #tpu.memory_space<semaphore_mem>>
      %138 = tpu.memref_squeeze %137 : memref<1x1x!tpu.dma_semaphore, #tpu.memory_space<semaphore_mem>> -> memref<!tpu.dma_semaphore, #tpu.memory_space<semaphore_mem>>
      tpu.wait_dma2 semaphore(%138 : memref<!tpu.dma_semaphore, #tpu.memory_space<semaphore_mem>>) src(%134 : memref<1x128xf32, #tpu.memory_space<any>>) dst(%136 : memref<1x128xf32, #tpu.memory_space<vmem>>)
      %c3_i32_112 = arith.constant 3 : i32
      %c0_i32_113 = arith.constant 0 : i32
      %c0_i32_114 = arith.constant 0 : i32
      %139 = tpu.memref_slice %arg4[%c0_i32_113, %c0_i32_114] : memref<50x128xf32, #tpu.memory_space<any>> -> memref<1x128xf32, #tpu.memory_space<any>>
      %c3_i32_115 = arith.constant 3 : i32
      %c0_i32_116 = arith.constant 0 : i32
      %140 = tpu.memref_slice %arg15[%123, %c3_i32_115, %c0_i32_116] : memref<2x8x128xf32, #tpu.memory_space<vmem>> -> memref<1x1x128xf32, #tpu.memory_space<vmem>>
      %141 = tpu.memref_squeeze %140 : memref<1x1x128xf32, #tpu.memory_space<vmem>> -> memref<1x128xf32, #tpu.memory_space<vmem>>
      %142 = tpu.memref_slice %arg17[%123, %c3_i32_112] : memref<2x9x!tpu.dma_semaphore, #tpu.memory_space<semaphore_mem>> -> memref<1x1x!tpu.dma_semaphore, #tpu.memory_space<semaphore_mem>>
      %143 = tpu.memref_squeeze %142 : memref<1x1x!tpu.dma_semaphore, #tpu.memory_space<semaphore_mem>> -> memref<!tpu.dma_semaphore, #tpu.memory_space<semaphore_mem>>
      tpu.wait_dma2 semaphore(%143 : memref<!tpu.dma_semaphore, #tpu.memory_space<semaphore_mem>>) src(%139 : memref<1x128xf32, #tpu.memory_space<any>>) dst(%141 : memref<1x128xf32, #tpu.memory_space<vmem>>)
      %c4_i32_117 = arith.constant 4 : i32
      %c0_i32_118 = arith.constant 0 : i32
      %c0_i32_119 = arith.constant 0 : i32
      %144 = tpu.memref_slice %arg4[%c0_i32_118, %c0_i32_119] : memref<50x128xf32, #tpu.memory_space<any>> -> memref<1x128xf32, #tpu.memory_space<any>>
      %c4_i32_120 = arith.constant 4 : i32
      %c0_i32_121 = arith.constant 0 : i32
      %145 = tpu.memref_slice %arg15[%123, %c4_i32_120, %c0_i32_121] : memref<2x8x128xf32, #tpu.memory_space<vmem>> -> memref<1x1x128xf32, #tpu.memory_space<vmem>>
      %146 = tpu.memref_squeeze %145 : memref<1x1x128xf32, #tpu.memory_space<vmem>> -> memref<1x128xf32, #tpu.memory_space<vmem>>
      %147 = tpu.memref_slice %arg17[%123, %c4_i32_117] : memref<2x9x!tpu.dma_semaphore, #tpu.memory_space<semaphore_mem>> -> memref<1x1x!tpu.dma_semaphore, #tpu.memory_space<semaphore_mem>>
      %148 = tpu.memref_squeeze %147 : memref<1x1x!tpu.dma_semaphore, #tpu.memory_space<semaphore_mem>> -> memref<!tpu.dma_semaphore, #tpu.memory_space<semaphore_mem>>
      tpu.wait_dma2 semaphore(%148 : memref<!tpu.dma_semaphore, #tpu.memory_space<semaphore_mem>>) src(%144 : memref<1x128xf32, #tpu.memory_space<any>>) dst(%146 : memref<1x128xf32, #tpu.memory_space<vmem>>)
      %c5_i32_122 = arith.constant 5 : i32
      %c0_i32_123 = arith.constant 0 : i32
      %c0_i32_124 = arith.constant 0 : i32
      %149 = tpu.memref_slice %arg4[%c0_i32_123, %c0_i32_124] : memref<50x128xf32, #tpu.memory_space<any>> -> memref<1x128xf32, #tpu.memory_space<any>>
      %c5_i32_125 = arith.constant 5 : i32
      %c0_i32_126 = arith.constant 0 : i32
      %150 = tpu.memref_slice %arg15[%123, %c5_i32_125, %c0_i32_126] : memref<2x8x128xf32, #tpu.memory_space<vmem>> -> memref<1x1x128xf32, #tpu.memory_space<vmem>>
      %151 = tpu.memref_squeeze %150 : memref<1x1x128xf32, #tpu.memory_space<vmem>> -> memref<1x128xf32, #tpu.memory_space<vmem>>
      %152 = tpu.memref_slice %arg17[%123, %c5_i32_122] : memref<2x9x!tpu.dma_semaphore, #tpu.memory_space<semaphore_mem>> -> memref<1x1x!tpu.dma_semaphore, #tpu.memory_space<semaphore_mem>>
      %153 = tpu.memref_squeeze %152 : memref<1x1x!tpu.dma_semaphore, #tpu.memory_space<semaphore_mem>> -> memref<!tpu.dma_semaphore, #tpu.memory_space<semaphore_mem>>
      tpu.wait_dma2 semaphore(%153 : memref<!tpu.dma_semaphore, #tpu.memory_space<semaphore_mem>>) src(%149 : memref<1x128xf32, #tpu.memory_space<any>>) dst(%151 : memref<1x128xf32, #tpu.memory_space<vmem>>)
      %c6_i32_127 = arith.constant 6 : i32
      %c0_i32_128 = arith.constant 0 : i32
      %c0_i32_129 = arith.constant 0 : i32
      %154 = tpu.memref_slice %arg4[%c0_i32_128, %c0_i32_129] : memref<50x128xf32, #tpu.memory_space<any>> -> memref<1x128xf32, #tpu.memory_space<any>>
      %c6_i32_130 = arith.constant 6 : i32
      %c0_i32_131 = arith.constant 0 : i32
      %155 = tpu.memref_slice %arg15[%123, %c6_i32_130, %c0_i32_131] : memref<2x8x128xf32, #tpu.memory_space<vmem>> -> memref<1x1x128xf32, #tpu.memory_space<vmem>>
      %156 = tpu.memref_squeeze %155 : memref<1x1x128xf32, #tpu.memory_space<vmem>> -> memref<1x128xf32, #tpu.memory_space<vmem>>
      %157 = tpu.memref_slice %arg17[%123, %c6_i32_127] : memref<2x9x!tpu.dma_semaphore, #tpu.memory_space<semaphore_mem>> -> memref<1x1x!tpu.dma_semaphore, #tpu.memory_space<semaphore_mem>>
      %158 = tpu.memref_squeeze %157 : memref<1x1x!tpu.dma_semaphore, #tpu.memory_space<semaphore_mem>> -> memref<!tpu.dma_semaphore, #tpu.memory_space<semaphore_mem>>
      tpu.wait_dma2 semaphore(%158 : memref<!tpu.dma_semaphore, #tpu.memory_space<semaphore_mem>>) src(%154 : memref<1x128xf32, #tpu.memory_space<any>>) dst(%156 : memref<1x128xf32, #tpu.memory_space<vmem>>)
      %c7_i32_132 = arith.constant 7 : i32
      %c0_i32_133 = arith.constant 0 : i32
      %c0_i32_134 = arith.constant 0 : i32
      %159 = tpu.memref_slice %arg4[%c0_i32_133, %c0_i32_134] : memref<50x128xf32, #tpu.memory_space<any>> -> memref<1x128xf32, #tpu.memory_space<any>>
      %c7_i32_135 = arith.constant 7 : i32
      %c0_i32_136 = arith.constant 0 : i32
      %160 = tpu.memref_slice %arg15[%123, %c7_i32_135, %c0_i32_136] : memref<2x8x128xf32, #tpu.memory_space<vmem>> -> memref<1x1x128xf32, #tpu.memory_space<vmem>>
      %161 = tpu.memref_squeeze %160 : memref<1x1x128xf32, #tpu.memory_space<vmem>> -> memref<1x128xf32, #tpu.memory_space<vmem>>
      %162 = tpu.memref_slice %arg17[%123, %c7_i32_132] : memref<2x9x!tpu.dma_semaphore, #tpu.memory_space<semaphore_mem>> -> memref<1x1x!tpu.dma_semaphore, #tpu.memory_space<semaphore_mem>>
      %163 = tpu.memref_squeeze %162 : memref<1x1x!tpu.dma_semaphore, #tpu.memory_space<semaphore_mem>> -> memref<!tpu.dma_semaphore, #tpu.memory_space<semaphore_mem>>
      tpu.wait_dma2 semaphore(%163 : memref<!tpu.dma_semaphore, #tpu.memory_space<semaphore_mem>>) src(%159 : memref<1x128xf32, #tpu.memory_space<any>>) dst(%161 : memref<1x128xf32, #tpu.memory_space<vmem>>)
      %c8_i32_137 = arith.constant 8 : i32
      %c0_i32_138 = arith.constant 0 : i32
      %c0_i32_139 = arith.constant 0 : i32
      %164 = tpu.memref_slice %arg5[%c0_i32_138, %c0_i32_139] : memref<50x128xf32, #tpu.memory_space<any>> -> memref<1x128xf32, #tpu.memory_space<any>>
      %c0_i32_140 = arith.constant 0 : i32
      %c0_i32_141 = arith.constant 0 : i32
      %165 = tpu.memref_slice %arg16[%123, %c0_i32_140, %c0_i32_141] : memref<2x1x128xf32, #tpu.memory_space<vmem>> -> memref<1x1x128xf32, #tpu.memory_space<vmem>>
      %166 = tpu.memref_squeeze %165 : memref<1x1x128xf32, #tpu.memory_space<vmem>> -> memref<1x128xf32, #tpu.memory_space<vmem>>
      %167 = tpu.memref_slice %arg17[%123, %c8_i32_137] : memref<2x9x!tpu.dma_semaphore, #tpu.memory_space<semaphore_mem>> -> memref<1x1x!tpu.dma_semaphore, #tpu.memory_space<semaphore_mem>>
      %168 = tpu.memref_squeeze %167 : memref<1x1x!tpu.dma_semaphore, #tpu.memory_space<semaphore_mem>> -> memref<!tpu.dma_semaphore, #tpu.memory_space<semaphore_mem>>
      tpu.wait_dma2 semaphore(%168 : memref<!tpu.dma_semaphore, #tpu.memory_space<semaphore_mem>>) src(%164 : memref<1x128xf32, #tpu.memory_space<any>>) dst(%166 : memref<1x128xf32, #tpu.memory_space<vmem>>)
      %c1_i32_142 = arith.constant 1 : i32
      %169 = arith.addi %122, %c1_i32_142 : i32
      %c16_i32_143 = arith.constant 16 : i32
      %170 = arith.cmpi slt, %169, %c16_i32_143 : i32
      %171 = arith.extui %170 : i1 to i32
      %c0_i32_144 = arith.constant 0 : i32
      %172 = arith.cmpi ne, %171, %c0_i32_144 : i32
      scf.if %172 {
        %c1_i32_152 = arith.constant 1 : i32
        %185 = arith.addi %122, %c1_i32_152 : i32
        %c1_i32_153 = arith.constant 1 : i32
        %186 = arith.subi %c1_i32_153, %123 : i32
        %187 = arith.addi %0, %185 : i32
        %c8_i32_154 = arith.constant 8 : i32
        %188 = arith.muli %187, %c8_i32_154 : i32
        %c0_i32_155 = arith.constant 0 : i32
        %189 = arith.addi %188, %c0_i32_155 : i32
        %190 = arith.index_cast %189 : i32 to index
        %191 = memref.load %arg1[%190] : memref<512xi32, #tpu.memory_space<smem>>
        %c0_i32_156 = arith.constant 0 : i32
        %c0_i32_157 = arith.constant 0 : i32
        %192 = tpu.memref_slice %arg4[%191, %c0_i32_157] : memref<50x128xf32, #tpu.memory_space<any>> -> memref<1x128xf32, #tpu.memory_space<any>>
        %c0_i32_158 = arith.constant 0 : i32
        %c0_i32_159 = arith.constant 0 : i32
        %193 = tpu.memref_slice %arg15[%186, %c0_i32_158, %c0_i32_159] : memref<2x8x128xf32, #tpu.memory_space<vmem>> -> memref<1x1x128xf32, #tpu.memory_space<vmem>>
        %194 = tpu.memref_squeeze %193 : memref<1x1x128xf32, #tpu.memory_space<vmem>> -> memref<1x128xf32, #tpu.memory_space<vmem>>
        %195 = tpu.memref_slice %arg17[%186, %c0_i32_156] : memref<2x9x!tpu.dma_semaphore, #tpu.memory_space<semaphore_mem>> -> memref<1x1x!tpu.dma_semaphore, #tpu.memory_space<semaphore_mem>>
        %196 = tpu.memref_squeeze %195 : memref<1x1x!tpu.dma_semaphore, #tpu.memory_space<semaphore_mem>> -> memref<!tpu.dma_semaphore, #tpu.memory_space<semaphore_mem>>
        tpu.enqueue_dma source(%192 : memref<1x128xf32, #tpu.memory_space<any>>) target(%194 : memref<1x128xf32, #tpu.memory_space<vmem>>) target_semaphore(%196 : memref<!tpu.dma_semaphore, #tpu.memory_space<semaphore_mem>>)
        %c8_i32_160 = arith.constant 8 : i32
        %197 = arith.muli %187, %c8_i32_160 : i32
        %c1_i32_161 = arith.constant 1 : i32
        %198 = arith.addi %197, %c1_i32_161 : i32
        %199 = arith.index_cast %198 : i32 to index
        %200 = memref.load %arg1[%199] : memref<512xi32, #tpu.memory_space<smem>>
        %c1_i32_162 = arith.constant 1 : i32
        %c0_i32_163 = arith.constant 0 : i32
        %201 = tpu.memref_slice %arg4[%200, %c0_i32_163] : memref<50x128xf32, #tpu.memory_space<any>> -> memref<1x128xf32, #tpu.memory_space<any>>
        %c1_i32_164 = arith.constant 1 : i32
        %c0_i32_165 = arith.constant 0 : i32
        %202 = tpu.memref_slice %arg15[%186, %c1_i32_164, %c0_i32_165] : memref<2x8x128xf32, #tpu.memory_space<vmem>> -> memref<1x1x128xf32, #tpu.memory_space<vmem>>
        %203 = tpu.memref_squeeze %202 : memref<1x1x128xf32, #tpu.memory_space<vmem>> -> memref<1x128xf32, #tpu.memory_space<vmem>>
        %204 = tpu.memref_slice %arg17[%186, %c1_i32_162] : memref<2x9x!tpu.dma_semaphore, #tpu.memory_space<semaphore_mem>> -> memref<1x1x!tpu.dma_semaphore, #tpu.memory_space<semaphore_mem>>
        %205 = tpu.memref_squeeze %204 : memref<1x1x!tpu.dma_semaphore, #tpu.memory_space<semaphore_mem>> -> memref<!tpu.dma_semaphore, #tpu.memory_space<semaphore_mem>>
        tpu.enqueue_dma source(%201 : memref<1x128xf32, #tpu.memory_space<any>>) target(%203 : memref<1x128xf32, #tpu.memory_space<vmem>>) target_semaphore(%205 : memref<!tpu.dma_semaphore, #tpu.memory_space<semaphore_mem>>)
        %c8_i32_166 = arith.constant 8 : i32
        %206 = arith.muli %187, %c8_i32_166 : i32
        %c2_i32_167 = arith.constant 2 : i32
        %207 = arith.addi %206, %c2_i32_167 : i32
        %208 = arith.index_cast %207 : i32 to index
        %209 = memref.load %arg1[%208] : memref<512xi32, #tpu.memory_space<smem>>
        %c2_i32_168 = arith.constant 2 : i32
        %c0_i32_169 = arith.constant 0 : i32
        %210 = tpu.memref_slice %arg4[%209, %c0_i32_169] : memref<50x128xf32, #tpu.memory_space<any>> -> memref<1x128xf32, #tpu.memory_space<any>>
        %c2_i32_170 = arith.constant 2 : i32
        %c0_i32_171 = arith.constant 0 : i32
        %211 = tpu.memref_slice %arg15[%186, %c2_i32_170, %c0_i32_171] : memref<2x8x128xf32, #tpu.memory_space<vmem>> -> memref<1x1x128xf32, #tpu.memory_space<vmem>>
        %212 = tpu.memref_squeeze %211 : memref<1x1x128xf32, #tpu.memory_space<vmem>> -> memref<1x128xf32, #tpu.memory_space<vmem>>
        %213 = tpu.memref_slice %arg17[%186, %c2_i32_168] : memref<2x9x!tpu.dma_semaphore, #tpu.memory_space<semaphore_mem>> -> memref<1x1x!tpu.dma_semaphore, #tpu.memory_space<semaphore_mem>>
        %214 = tpu.memref_squeeze %213 : memref<1x1x!tpu.dma_semaphore, #tpu.memory_space<semaphore_mem>> -> memref<!tpu.dma_semaphore, #tpu.memory_space<semaphore_mem>>
        tpu.enqueue_dma source(%210 : memref<1x128xf32, #tpu.memory_space<any>>) target(%212 : memref<1x128xf32, #tpu.memory_space<vmem>>) target_semaphore(%214 : memref<!tpu.dma_semaphore, #tpu.memory_space<semaphore_mem>>)
        %c8_i32_172 = arith.constant 8 : i32
        %215 = arith.muli %187, %c8_i32_172 : i32
        %c3_i32_173 = arith.constant 3 : i32
        %216 = arith.addi %215, %c3_i32_173 : i32
        %217 = arith.index_cast %216 : i32 to index
        %218 = memref.load %arg1[%217] : memref<512xi32, #tpu.memory_space<smem>>
        %c3_i32_174 = arith.constant 3 : i32
        %c0_i32_175 = arith.constant 0 : i32
        %219 = tpu.memref_slice %arg4[%218, %c0_i32_175] : memref<50x128xf32, #tpu.memory_space<any>> -> memref<1x128xf32, #tpu.memory_space<any>>
        %c3_i32_176 = arith.constant 3 : i32
        %c0_i32_177 = arith.constant 0 : i32
        %220 = tpu.memref_slice %arg15[%186, %c3_i32_176, %c0_i32_177] : memref<2x8x128xf32, #tpu.memory_space<vmem>> -> memref<1x1x128xf32, #tpu.memory_space<vmem>>
        %221 = tpu.memref_squeeze %220 : memref<1x1x128xf32, #tpu.memory_space<vmem>> -> memref<1x128xf32, #tpu.memory_space<vmem>>
        %222 = tpu.memref_slice %arg17[%186, %c3_i32_174] : memref<2x9x!tpu.dma_semaphore, #tpu.memory_space<semaphore_mem>> -> memref<1x1x!tpu.dma_semaphore, #tpu.memory_space<semaphore_mem>>
        %223 = tpu.memref_squeeze %222 : memref<1x1x!tpu.dma_semaphore, #tpu.memory_space<semaphore_mem>> -> memref<!tpu.dma_semaphore, #tpu.memory_space<semaphore_mem>>
        tpu.enqueue_dma source(%219 : memref<1x128xf32, #tpu.memory_space<any>>) target(%221 : memref<1x128xf32, #tpu.memory_space<vmem>>) target_semaphore(%223 : memref<!tpu.dma_semaphore, #tpu.memory_space<semaphore_mem>>)
        %c8_i32_178 = arith.constant 8 : i32
        %224 = arith.muli %187, %c8_i32_178 : i32
        %c4_i32_179 = arith.constant 4 : i32
        %225 = arith.addi %224, %c4_i32_179 : i32
        %226 = arith.index_cast %225 : i32 to index
        %227 = memref.load %arg1[%226] : memref<512xi32, #tpu.memory_space<smem>>
        %c4_i32_180 = arith.constant 4 : i32
        %c0_i32_181 = arith.constant 0 : i32
        %228 = tpu.memref_slice %arg4[%227, %c0_i32_181] : memref<50x128xf32, #tpu.memory_space<any>> -> memref<1x128xf32, #tpu.memory_space<any>>
        %c4_i32_182 = arith.constant 4 : i32
        %c0_i32_183 = arith.constant 0 : i32
        %229 = tpu.memref_slice %arg15[%186, %c4_i32_182, %c0_i32_183] : memref<2x8x128xf32, #tpu.memory_space<vmem>> -> memref<1x1x128xf32, #tpu.memory_space<vmem>>
        %230 = tpu.memref_squeeze %229 : memref<1x1x128xf32, #tpu.memory_space<vmem>> -> memref<1x128xf32, #tpu.memory_space<vmem>>
        %231 = tpu.memref_slice %arg17[%186, %c4_i32_180] : memref<2x9x!tpu.dma_semaphore, #tpu.memory_space<semaphore_mem>> -> memref<1x1x!tpu.dma_semaphore, #tpu.memory_space<semaphore_mem>>
        %232 = tpu.memref_squeeze %231 : memref<1x1x!tpu.dma_semaphore, #tpu.memory_space<semaphore_mem>> -> memref<!tpu.dma_semaphore, #tpu.memory_space<semaphore_mem>>
        tpu.enqueue_dma source(%228 : memref<1x128xf32, #tpu.memory_space<any>>) target(%230 : memref<1x128xf32, #tpu.memory_space<vmem>>) target_semaphore(%232 : memref<!tpu.dma_semaphore, #tpu.memory_space<semaphore_mem>>)
        %c8_i32_184 = arith.constant 8 : i32
        %233 = arith.muli %187, %c8_i32_184 : i32
        %c5_i32_185 = arith.constant 5 : i32
        %234 = arith.addi %233, %c5_i32_185 : i32
        %235 = arith.index_cast %234 : i32 to index
        %236 = memref.load %arg1[%235] : memref<512xi32, #tpu.memory_space<smem>>
        %c5_i32_186 = arith.constant 5 : i32
        %c0_i32_187 = arith.constant 0 : i32
        %237 = tpu.memref_slice %arg4[%236, %c0_i32_187] : memref<50x128xf32, #tpu.memory_space<any>> -> memref<1x128xf32, #tpu.memory_space<any>>
        %c5_i32_188 = arith.constant 5 : i32
        %c0_i32_189 = arith.constant 0 : i32
        %238 = tpu.memref_slice %arg15[%186, %c5_i32_188, %c0_i32_189] : memref<2x8x128xf32, #tpu.memory_space<vmem>> -> memref<1x1x128xf32, #tpu.memory_space<vmem>>
        %239 = tpu.memref_squeeze %238 : memref<1x1x128xf32, #tpu.memory_space<vmem>> -> memref<1x128xf32, #tpu.memory_space<vmem>>
        %240 = tpu.memref_slice %arg17[%186, %c5_i32_186] : memref<2x9x!tpu.dma_semaphore, #tpu.memory_space<semaphore_mem>> -> memref<1x1x!tpu.dma_semaphore, #tpu.memory_space<semaphore_mem>>
        %241 = tpu.memref_squeeze %240 : memref<1x1x!tpu.dma_semaphore, #tpu.memory_space<semaphore_mem>> -> memref<!tpu.dma_semaphore, #tpu.memory_space<semaphore_mem>>
        tpu.enqueue_dma source(%237 : memref<1x128xf32, #tpu.memory_space<any>>) target(%239 : memref<1x128xf32, #tpu.memory_space<vmem>>) target_semaphore(%241 : memref<!tpu.dma_semaphore, #tpu.memory_space<semaphore_mem>>)
        %c8_i32_190 = arith.constant 8 : i32
        %242 = arith.muli %187, %c8_i32_190 : i32
        %c6_i32_191 = arith.constant 6 : i32
        %243 = arith.addi %242, %c6_i32_191 : i32
        %244 = arith.index_cast %243 : i32 to index
        %245 = memref.load %arg1[%244] : memref<512xi32, #tpu.memory_space<smem>>
        %c6_i32_192 = arith.constant 6 : i32
        %c0_i32_193 = arith.constant 0 : i32
        %246 = tpu.memref_slice %arg4[%245, %c0_i32_193] : memref<50x128xf32, #tpu.memory_space<any>> -> memref<1x128xf32, #tpu.memory_space<any>>
        %c6_i32_194 = arith.constant 6 : i32
        %c0_i32_195 = arith.constant 0 : i32
        %247 = tpu.memref_slice %arg15[%186, %c6_i32_194, %c0_i32_195] : memref<2x8x128xf32, #tpu.memory_space<vmem>> -> memref<1x1x128xf32, #tpu.memory_space<vmem>>
        %248 = tpu.memref_squeeze %247 : memref<1x1x128xf32, #tpu.memory_space<vmem>> -> memref<1x128xf32, #tpu.memory_space<vmem>>
        %249 = tpu.memref_slice %arg17[%186, %c6_i32_192] : memref<2x9x!tpu.dma_semaphore, #tpu.memory_space<semaphore_mem>> -> memref<1x1x!tpu.dma_semaphore, #tpu.memory_space<semaphore_mem>>
        %250 = tpu.memref_squeeze %249 : memref<1x1x!tpu.dma_semaphore, #tpu.memory_space<semaphore_mem>> -> memref<!tpu.dma_semaphore, #tpu.memory_space<semaphore_mem>>
        tpu.enqueue_dma source(%246 : memref<1x128xf32, #tpu.memory_space<any>>) target(%248 : memref<1x128xf32, #tpu.memory_space<vmem>>) target_semaphore(%250 : memref<!tpu.dma_semaphore, #tpu.memory_space<semaphore_mem>>)
        %c8_i32_196 = arith.constant 8 : i32
        %251 = arith.muli %187, %c8_i32_196 : i32
        %c7_i32_197 = arith.constant 7 : i32
        %252 = arith.addi %251, %c7_i32_197 : i32
        %253 = arith.index_cast %252 : i32 to index
        %254 = memref.load %arg1[%253] : memref<512xi32, #tpu.memory_space<smem>>
        %c7_i32_198 = arith.constant 7 : i32
        %c0_i32_199 = arith.constant 0 : i32
        %255 = tpu.memref_slice %arg4[%254, %c0_i32_199] : memref<50x128xf32, #tpu.memory_space<any>> -> memref<1x128xf32, #tpu.memory_space<any>>
        %c7_i32_200 = arith.constant 7 : i32
        %c0_i32_201 = arith.constant 0 : i32
        %256 = tpu.memref_slice %arg15[%186, %c7_i32_200, %c0_i32_201] : memref<2x8x128xf32, #tpu.memory_space<vmem>> -> memref<1x1x128xf32, #tpu.memory_space<vmem>>
        %257 = tpu.memref_squeeze %256 : memref<1x1x128xf32, #tpu.memory_space<vmem>> -> memref<1x128xf32, #tpu.memory_space<vmem>>
        %258 = tpu.memref_slice %arg17[%186, %c7_i32_198] : memref<2x9x!tpu.dma_semaphore, #tpu.memory_space<semaphore_mem>> -> memref<1x1x!tpu.dma_semaphore, #tpu.memory_space<semaphore_mem>>
        %259 = tpu.memref_squeeze %258 : memref<1x1x!tpu.dma_semaphore, #tpu.memory_space<semaphore_mem>> -> memref<!tpu.dma_semaphore, #tpu.memory_space<semaphore_mem>>
        tpu.enqueue_dma source(%255 : memref<1x128xf32, #tpu.memory_space<any>>) target(%257 : memref<1x128xf32, #tpu.memory_space<vmem>>) target_semaphore(%259 : memref<!tpu.dma_semaphore, #tpu.memory_space<semaphore_mem>>)
        %260 = arith.index_cast %187 : i32 to index
        %261 = memref.load %arg2[%260] : memref<64xi32, #tpu.memory_space<smem>>
        %c8_i32_202 = arith.constant 8 : i32
        %c0_i32_203 = arith.constant 0 : i32
        %262 = tpu.memref_slice %arg5[%261, %c0_i32_203] : memref<50x128xf32, #tpu.memory_space<any>> -> memref<1x128xf32, #tpu.memory_space<any>>
        %c0_i32_204 = arith.constant 0 : i32
        %c0_i32_205 = arith.constant 0 : i32
        %263 = tpu.memref_slice %arg16[%186, %c0_i32_204, %c0_i32_205] : memref<2x1x128xf32, #tpu.memory_space<vmem>> -> memref<1x1x128xf32, #tpu.memory_space<vmem>>
        %264 = tpu.memref_squeeze %263 : memref<1x1x128xf32, #tpu.memory_space<vmem>> -> memref<1x128xf32, #tpu.memory_space<vmem>>
        %265 = tpu.memref_slice %arg17[%186, %c8_i32_202] : memref<2x9x!tpu.dma_semaphore, #tpu.memory_space<semaphore_mem>> -> memref<1x1x!tpu.dma_semaphore, #tpu.memory_space<semaphore_mem>>
        %266 = tpu.memref_squeeze %265 : memref<1x1x!tpu.dma_semaphore, #tpu.memory_space<semaphore_mem>> -> memref<!tpu.dma_semaphore, #tpu.memory_space<semaphore_mem>>
        tpu.enqueue_dma source(%262 : memref<1x128xf32, #tpu.memory_space<any>>) target(%264 : memref<1x128xf32, #tpu.memory_space<vmem>>) target_semaphore(%266 : memref<!tpu.dma_semaphore, #tpu.memory_space<semaphore_mem>>)
      } else {
      }
      %173 = arith.index_cast %123 : i32 to index
      %c0_145 = arith.constant 0 : index
      %c0_146 = arith.constant 0 : index
      %174 = vector.load %arg15[%173, %c0_145, %c0_146] : memref<2x8x128xf32, #tpu.memory_space<vmem>>, vector<1x8x128xf32>
      %175 = vector.shape_cast %174 : vector<1x8x128xf32> to vector<8x128xf32>
      %cst_147 = arith.constant dense<0.000000e+00> : vector<128xf32>
      %176 = vector.multi_reduction <add>, %175, %cst_147 [0] : vector<8x128xf32> to vector<128xf32>
      %177 = vector.shape_cast %176 : vector<128xf32> to vector<1x128xf32>
      %178 = arith.index_cast %122 : i32 to index
      %c0_148 = arith.constant 0 : index
      %179 = vector.load %arg18[%178, %c0_148] : memref<16x128xf32, #tpu.memory_space<vmem>>, vector<1x128xf32>
      tpu.vector_store %arg18[%178, %c0_148], %177 {strides = array<i32>} : memref<16x128xf32, #tpu.memory_space<vmem>>, vector<1x128xf32>,
      %180 = arith.index_cast %123 : i32 to index
      %c0_149 = arith.constant 0 : index
      %c0_150 = arith.constant 0 : index
      %181 = vector.load %arg16[%180, %c0_149, %c0_150] : memref<2x1x128xf32, #tpu.memory_space<vmem>>, vector<1x1x128xf32>
      %182 = vector.shape_cast %181 : vector<1x1x128xf32> to vector<1x128xf32>
      %183 = arith.index_cast %122 : i32 to index
      %c0_151 = arith.constant 0 : index
      %184 = vector.load %arg19[%183, %c0_151] : memref<16x128xf32, #tpu.memory_space<vmem>>, vector<1x128xf32>
      tpu.vector_store %arg19[%183, %c0_151], %182 {strides = array<i32>} : memref<16x128xf32, #tpu.memory_space<vmem>>, vector<1x128xf32>,
    }
    %c16_i32_65 = arith.constant 16 : i32
    %c0 = arith.constant 0 : index
    %c0_66 = arith.constant 0 : index
    %82 = vector.load %arg18[%c0, %c0_66] : memref<16x128xf32, #tpu.memory_space<vmem>>, vector<16x128xf32>
    %c0_67 = arith.constant 0 : index
    %c0_68 = arith.constant 0 : index
    %83 = vector.load %arg3[%c0_67, %c0_68] : memref<16x1xf32, #tpu.memory_space<vmem>>, vector<16x1xf32>
    %84 = vector.broadcast %83 : vector<16x1xf32> to vector<16x128xf32>
    %85 = arith.mulf %82, %84 : vector<16x128xf32>
    %86 = arith.truncf %85 : vector<16x128xf32> to vector<16x128xbf16>
    %c0_69 = arith.constant 0 : index
    %c0_70 = arith.constant 0 : index
    %87 = vector.load %arg6[%c0_69, %c0_70] : memref<128x128xbf16, #tpu.memory_space<vmem>>, vector<128x128xbf16>
    %cst = arith.constant dense<0.000000e+00> : vector<16x128xf32>
    %88 = tpu.matmul %86, %87, %cst {dimension_numbers = #tpu.dot_dimension_numbers<[1], [0], [0], [1], [0, 0, 1, 1], [], []>} : vector<16x128xbf16>, vector<128x128xbf16>, vector<16x128xf32> -> vector<16x128xf32>
    %c0_71 = arith.constant 0 : index
    %c0_72 = arith.constant 0 : index
    %89 = vector.load %arg7[%c0_71, %c0_72] : memref<1x128xf32, #tpu.memory_space<vmem>>, vector<1x128xf32>
    %90 = vector.broadcast %89 : vector<1x128xf32> to vector<16x128xf32>
    %91 = arith.addf %88, %90 : vector<16x128xf32>
    %92 = math.tanh %91 : vector<16x128xf32>
    %93 = arith.truncf %92 : vector<16x128xf32> to vector<16x128xbf16>
    %c0_73 = arith.constant 0 : index
    %c0_74 = arith.constant 0 : index
    %94 = vector.load %arg8[%c0_73, %c0_74] : memref<128x256xbf16, #tpu.memory_space<vmem>>, vector<128x256xbf16>
    %cst_75 = arith.constant dense<0.000000e+00> : vector<16x256xf32>
    %95 = tpu.matmul %93, %94, %cst_75 {dimension_numbers = #tpu.dot_dimension_numbers<[1], [0], [0], [1], [0, 0, 1, 1], [], []>} : vector<16x128xbf16>, vector<128x256xbf16>, vector<16x256xf32> -> vector<16x256xf32>
    %c0_76 = arith.constant 0 : index
    %c0_77 = arith.constant 0 : index
    %96 = vector.load %arg9[%c0_76, %c0_77] : memref<1x256xf32, #tpu.memory_space<vmem>>, vector<1x256xf32>
    %97 = vector.broadcast %96 : vector<1x256xf32> to vector<16x256xf32>
    %98 = arith.addf %95, %97 : vector<16x256xf32>
    %99 = vector.extract_strided_slice %98 {offsets = [0, 0], sizes = [16, 128], strides = [1, 1]} : vector<16x256xf32> to vector<16x128xf32>
    %100 = arith.truncf %99 : vector<16x128xf32> to vector<16x128xbf16>
    %c0_78 = arith.constant 0 : index
    %c0_79 = arith.constant 0 : index
    %101 = vector.load %arg10[%c0_78, %c0_79] : memref<128x128xbf16, #tpu.memory_space<vmem>>, vector<128x128xbf16>
    %cst_80 = arith.constant dense<0.000000e+00> : vector<16x128xf32>
    %102 = tpu.matmul %100, %101, %cst_80 {dimension_numbers = #tpu.dot_dimension_numbers<[1], [0], [0], [1], [0, 0, 1, 1], [], []>} : vector<16x128xbf16>, vector<128x128xbf16>, vector<16x128xf32> -> vector<16x128xf32>
    %c0_81 = arith.constant 0 : index
    %c0_82 = arith.constant 0 : index
    %103 = vector.load %arg11[%c0_81, %c0_82] : memref<1x128xf32, #tpu.memory_space<vmem>>, vector<1x128xf32>
    %104 = vector.broadcast %103 : vector<1x128xf32> to vector<16x128xf32>
    %105 = arith.addf %102, %104 : vector<16x128xf32>
    %106 = math.tanh %105 : vector<16x128xf32>
    %107 = arith.truncf %106 : vector<16x128xf32> to vector<16x128xbf16>
    %c0_83 = arith.constant 0 : index
    %c0_84 = arith.constant 0 : index
    %108 = vector.load %arg12[%c0_83, %c0_84] : memref<128x128xbf16, #tpu.memory_space<vmem>>, vector<128x128xbf16>
    %cst_85 = arith.constant dense<0.000000e+00> : vector<16x128xf32>
    %109 = tpu.matmul %107, %108, %cst_85 {dimension_numbers = #tpu.dot_dimension_numbers<[1], [0], [0], [1], [0, 0, 1, 1], [], []>} : vector<16x128xbf16>, vector<128x128xbf16>, vector<16x128xf32> -> vector<16x128xf32>
    %c0_86 = arith.constant 0 : index
    %c0_87 = arith.constant 0 : index
    %110 = vector.load %arg13[%c0_86, %c0_87] : memref<1x128xf32, #tpu.memory_space<vmem>>, vector<1x128xf32>
    %111 = vector.broadcast %110 : vector<1x128xf32> to vector<16x128xf32>
    %112 = arith.addf %109, %111 : vector<16x128xf32>
    %c0_88 = arith.constant 0 : index
    %c0_89 = arith.constant 0 : index
    %113 = vector.load %arg19[%c0_88, %c0_89] : memref<16x128xf32, #tpu.memory_space<vmem>>, vector<16x128xf32>
    %114 = arith.mulf %112, %113 : vector<16x128xf32>
    %cst_90 = arith.constant dense<0.000000e+00> : vector<16xf32>
    %115 = vector.multi_reduction <add>, %114, %cst_90 [1] : vector<16x128xf32> to vector<16xf32>
    %116 = vector.shape_cast %115 : vector<16xf32> to vector<16x1xf32>
    %c0_91 = arith.constant 0 : index
    %c0_92 = arith.constant 0 : index
    %117 = vector.load %arg14[%c0_91, %c0_92] : memref<16x384xf32, #tpu.memory_space<vmem>>, vector<16x256xf32>
    tpu.vector_store %arg14[%c0_91, %c0_92], %98 {strides = array<i32>} : memref<16x384xf32, #tpu.memory_space<vmem>>, vector<16x256xf32>,
    %118 = vector.shape_cast %116 : vector<16x1xf32> to vector<16x1xf32>
    %119 = vector.broadcast %118 : vector<16x1xf32> to vector<16x128xf32>
    %c0_93 = arith.constant 0 : index
    %c256 = arith.constant 256 : index
    %120 = vector.load %arg14[%c0_93, %c256] : memref<16x384xf32, #tpu.memory_space<vmem>>, vector<16x128xf32>
    tpu.vector_store %arg14[%c0_93, %c256], %119 {strides = array<i32>} : memref<16x384xf32, #tpu.memory_space<vmem>>, vector<16x128xf32>,
    return
  }
  func.func @transform_0(%arg0: i32, %arg1: memref<512xi32, #tpu.memory_space<smem>>, %arg2: memref<64xi32, #tpu.memory_space<smem>>) -> (i32, i32) {
    %c0_i32 = arith.constant 0 : i32
    %c0_i32_0 = arith.constant 0 : i32
    return %arg0, %c0_i32 : i32, i32
  }
  func.func @transform_3(%arg0: i32, %arg1: memref<512xi32, #tpu.memory_space<smem>>, %arg2: memref<64xi32, #tpu.memory_space<smem>>) -> (i32, i32) {
    %c0_i32 = arith.constant 0 : i32
    %c0_i32_0 = arith.constant 0 : i32
    %c0_i32_1 = arith.constant 0 : i32
    return %c0_i32, %c0_i32_0 : i32, i32
  }
  func.func @transform_4(%arg0: i32, %arg1: memref<512xi32, #tpu.memory_space<smem>>, %arg2: memref<64xi32, #tpu.memory_space<smem>>) -> (i32, i32) {
    %c0_i32 = arith.constant 0 : i32
    %c0_i32_0 = arith.constant 0 : i32
    %c0_i32_1 = arith.constant 0 : i32
    return %c0_i32, %c0_i32_0 : i32, i32
  }
  func.func @transform_5(%arg0: i32, %arg1: memref<512xi32, #tpu.memory_space<smem>>, %arg2: memref<64xi32, #tpu.memory_space<smem>>) -> (i32, i32) {
    %c0_i32 = arith.constant 0 : i32
    %c0_i32_0 = arith.constant 0 : i32
    %c0_i32_1 = arith.constant 0 : i32
    return %c0_i32, %c0_i32_0 : i32, i32
  }
  func.func @transform_6(%arg0: i32, %arg1: memref<512xi32, #tpu.memory_space<smem>>, %arg2: memref<64xi32, #tpu.memory_space<smem>>) -> (i32, i32) {
    %c0_i32 = arith.constant 0 : i32
    %c0_i32_0 = arith.constant 0 : i32
    %c0_i32_1 = arith.constant 0 : i32
    return %c0_i32, %c0_i32_0 : i32, i32
  }
  func.func @transform_7(%arg0: i32, %arg1: memref<512xi32, #tpu.memory_space<smem>>, %arg2: memref<64xi32, #tpu.memory_space<smem>>) -> (i32, i32) {
    %c0_i32 = arith.constant 0 : i32
    %c0_i32_0 = arith.constant 0 : i32
    %c0_i32_1 = arith.constant 0 : i32
    return %c0_i32, %c0_i32_0 : i32, i32
  }
  func.func @transform_8(%arg0: i32, %arg1: memref<512xi32, #tpu.memory_space<smem>>, %arg2: memref<64xi32, #tpu.memory_space<smem>>) -> (i32, i32) {
    %c0_i32 = arith.constant 0 : i32
    %c0_i32_0 = arith.constant 0 : i32
    %c0_i32_1 = arith.constant 0 : i32
    return %c0_i32, %c0_i32_0 : i32, i32
  }
  func.func @transform_9(%arg0: i32, %arg1: memref<512xi32, #tpu.memory_space<smem>>, %arg2: memref<64xi32, #tpu.memory_space<smem>>) -> (i32, i32) {
    %c0_i32 = arith.constant 0 : i32
    %c0_i32_0 = arith.constant 0 : i32
    %c0_i32_1 = arith.constant 0 : i32
    return %c0_i32, %c0_i32_0 : i32, i32
  }
  func.func @transform_10(%arg0: i32, %arg1: memref<512xi32, #tpu.memory_space<smem>>, %arg2: memref<64xi32, #tpu.memory_space<smem>>) -> (i32, i32) {
    %c0_i32 = arith.constant 0 : i32
    %c0_i32_0 = arith.constant 0 : i32
    %c0_i32_1 = arith.constant 0 : i32
    return %c0_i32, %c0_i32_0 : i32, i32
  }
  func.func @transform_11(%arg0: i32, %arg1: memref<512xi32, #tpu.memory_space<smem>>, %arg2: memref<64xi32, #tpu.memory_space<smem>>) -> (i32, i32) {
    %c0_i32 = arith.constant 0 : i32
    %c0_i32_0 = arith.constant 0 : i32
    return %arg0, %c0_i32 : i32, i32
  }
}

</mosaic_0001>

<llo_original>
// kernel: tpu_custom_call.1
$region0: #{tpu_custom_call.1}
  #allocation0 [shape = 'u32[]', space=smem, size = 0x4, offset = 0x4, fixed_abs, tag = 'smem constant byte address 0x4 - core index']
  #allocation1 [shape = 'u32[72,128]{1,0:T(1,128)}', space=vmem, size = 0x9000, scoped, tag = 'internal scratch']
  #allocation2 [shape = 'f32[2,8,128]{2,1,0:T(8,128)}', space=vmem, size = 0x2000, scoped, tag = 'scratch operand']
  #allocation3 [shape = 'f32[2,1,128]{2,1,0:T(1,128)}', space=vmem, size = 0x400, scoped, tag = 'scratch operand']
  #allocation4 [shape = 's32[18]{0}', space=sflag, size = 0x48, scoped, tag = 'scratch operand']
  #allocation5 [shape = 'f32[16,128]{1,0:T(8,128)}', space=vmem, size = 0x2000, scoped, tag = 'scratch operand']
  #allocation6 [shape = 'f32[16,128]{1,0:T(8,128)}', space=vmem, size = 0x2000, scoped, tag = 'scratch operand']
  #allocation7 [shape = 's32[1]{0}', space=sflag, size = 0x4, scoped, tag = 'scoped memory for tpu_custom_call.1']
  #allocation8 [shape = 'u8[2048]{0}', space=smem, size = 0x800, scoped, tag = 'prefetched SMEM operand 0']
  #allocation9 [shape = 'u8[512]{0}', space=smem, size = 0x200, scoped, tag = 'prefetched SMEM operand 1']
  #allocation19 [shape = 's32[]', space=sflag, size = 0x4, offset = 0, fixed_abs, tag = 'sflag constant byte address 0x0 - dummy sync flag']
  #allocation20 [shape = 's32[]', space=sflag, size = 0x4, offset = 0, fixed_abs, tag = 'sflag constant byte address 0x0 - dummy sync flag']
  #allocation21 [shape = 'u32[]', space=smem, size = 0x4, offset = 0x44, fixed_abs, tag = 'smem constant byte address 0x44 - assertion arg 0']
  #allocation22 [shape = 'u32[]', space=smem, size = 0x4, offset = 0x48, fixed_abs, tag = 'smem constant byte address 0x48 - assertion arg 1']
  #allocation23 [shape = 's32[]', space=sflag, size = 0x4, offset = 0, fixed_abs, tag = 'sflag constant byte address 0x0 - dummy sync flag']
  #allocation24 [shape = 's32[]', space=sflag, size = 0x4, offset = 0, fixed_abs, tag = 'sflag constant byte address 0x0 - dummy sync flag']
  #allocation25 [shape = 's32[]', space=sflag, size = 0x4, offset = 0, fixed_abs, tag = 'sflag constant byte address 0x0 - dummy sync flag']
  #allocation26 [shape = 's32[]', space=sflag, size = 0x4, offset = 0, fixed_abs, tag = 'sflag constant byte address 0x0 - dummy sync flag']
  #allocation27 [shape = 's32[]', space=sflag, size = 0x4, offset = 0, fixed_abs, tag = 'sflag constant byte address 0x0 - dummy sync flag']
  #allocation28 [shape = 's32[]', space=sflag, size = 0x4, offset = 0, fixed_abs, tag = 'sflag constant byte address 0x0 - dummy sync flag']
  #allocation29 [shape = 's32[]', space=sflag, size = 0x4, offset = 0, fixed_abs, tag = 'sflag constant byte address 0x0 - dummy sync flag']
  #allocation30 [shape = 's32[]', space=sflag, size = 0x4, offset = 0, fixed_abs, tag = 'sflag constant byte address 0x0 - dummy sync flag']
  #allocation31 [shape = 's32[]', space=sflag, size = 0x4, offset = 0, fixed_abs, tag = 'sflag constant byte address 0x0 - dummy sync flag']
  #allocation32 [shape = 's32[]', space=sflag, size = 0x4, offset = 0, fixed_abs, tag = 'sflag constant byte address 0x0 - dummy sync flag']
  #allocation33 [shape = 's32[]', space=sflag, size = 0x4, offset = 0, fixed_abs, tag = 'sflag constant byte address 0x0 - dummy sync flag']
  #allocation34 [shape = 's32[]', space=sflag, size = 0x4, offset = 0, fixed_abs, tag = 'sflag constant byte address 0x0 - dummy sync flag']
  #allocation35 [shape = 's32[]', space=sflag, size = 0x4, offset = 0, fixed_abs, tag = 'sflag constant byte address 0x0 - dummy sync flag']
  #allocation36 [shape = 's32[]', space=sflag, size = 0x4, offset = 0, fixed_abs, tag = 'sflag constant byte address 0x0 - dummy sync flag']
  #allocation37 [shape = 's32[]', space=sflag, size = 0x4, offset = 0, fixed_abs, tag = 'sflag constant byte address 0x0 - dummy sync flag']
  #allocation38 [shape = 's32[]', space=sflag, size = 0x4, offset = 0, fixed_abs, tag = 'sflag constant byte address 0x0 - dummy sync flag']
  #allocation39 [shape = 's32[]', space=sflag, size = 0x4, offset = 0, fixed_abs, tag = 'sflag constant byte address 0x0 - dummy sync flag']
  #allocation40 [shape = 's32[]', space=sflag, size = 0x4, offset = 0, fixed_abs, tag = 'sflag constant byte address 0x0 - dummy sync flag']
  #allocation41 [shape = 's32[]', space=sflag, size = 0x4, offset = 0, fixed_abs, tag = 'sflag constant byte address 0x0 - dummy sync flag']
  #allocation42 [shape = 's32[]', space=sflag, size = 0x4, offset = 0, fixed_abs, tag = 'sflag constant byte address 0x0 - dummy sync flag']
  #allocation43 [shape = 's32[]', space=sflag, size = 0x4, offset = 0, fixed_abs, tag = 'sflag constant byte address 0x0 - dummy sync flag']
  #allocation44 [shape = 's32[]', space=sflag, size = 0x4, offset = 0, fixed_abs, tag = 'sflag constant byte address 0x0 - dummy sync flag']
  #allocation45 [shape = 's32[]', space=sflag, size = 0x4, offset = 0, fixed_abs, tag = 'sflag constant byte address 0x0 - dummy sync flag']
  #allocation46 [shape = 's32[]', space=sflag, size = 0x4, offset = 0, fixed_abs, tag = 'sflag constant byte address 0x0 - dummy sync flag']
  #allocation47 [shape = 's32[]', space=sflag, size = 0x4, offset = 0, fixed_abs, tag = 'sflag constant byte address 0x0 - dummy sync flag']
  #allocation48 [shape = 's32[]', space=sflag, size = 0x4, offset = 0, fixed_abs, tag = 'sflag constant byte address 0x0 - dummy sync flag']
  #allocation49 [shape = 's32[]', space=sflag, size = 0x4, offset = 0, fixed_abs, tag = 'sflag constant byte address 0x0 - dummy sync flag']
  #allocation50 [shape = 's32[]', space=sflag, size = 0x4, offset = 0, fixed_abs, tag = 'sflag constant byte address 0x0 - dummy sync flag']
  #allocation51 [shape = 's32[]', space=sflag, size = 0x4, offset = 0, fixed_abs, tag = 'sflag constant byte address 0x0 - dummy sync flag']
  #allocation52 [shape = 's32[]', space=sflag, size = 0x4, offset = 0, fixed_abs, tag = 'sflag constant byte address 0x0 - dummy sync flag']
  #allocation53 [shape = 's32[]', space=sflag, size = 0x4, offset = 0, fixed_abs, tag = 'sflag constant byte address 0x0 - dummy sync flag']
  #allocation54 [shape = 's32[]', space=sflag, size = 0x4, offset = 0, fixed_abs, tag = 'sflag constant byte address 0x0 - dummy sync flag']
  #allocation55 [shape = 's32[]', space=sflag, size = 0x4, offset = 0, fixed_abs, tag = 'sflag constant byte address 0x0 - dummy sync flag']
  #allocation56 [shape = 's32[]', space=sflag, size = 0x4, offset = 0, fixed_abs, tag = 'sflag constant byte address 0x0 - dummy sync flag']
  %s0 = inlined_call_operand.vmem [shape: s32[512], index: 0, kind: input, shape index: {}]
  %s1 = inlined_call_operand.hbm [shape: s32[64], index: 1, kind: input, shape index: {}]
  %s2 = inlined_call_operand.vmem [shape: f32[64,1], index: 2, kind: input, shape index: {}]
  %s3 = inlined_call_operand.hbm [shape: f32[50,128], index: 3, kind: input, shape index: {}]
  %s4 = inlined_call_operand.hbm [shape: f32[50,128], index: 4, kind: input, shape index: {}]
  %s5 = inlined_call_operand.vmem [shape: bf16[128,128], index: 5, kind: input, shape index: {}]
  %s6 = inlined_call_operand.hbm [shape: f32[1,128], index: 6, kind: input, shape index: {}]
  %s7 = inlined_call_operand.hbm [shape: bf16[128,256], index: 7, kind: input, shape index: {}]
  %s8 = inlined_call_operand.vmem [shape: f32[1,256], index: 8, kind: input, shape index: {}]
  %s9 = inlined_call_operand.hbm [shape: bf16[128,128], index: 9, kind: input, shape index: {}]
  %s10 = inlined_call_operand.vmem [shape: f32[1,128], index: 10, kind: input, shape index: {}]
  %s11 = inlined_call_operand.hbm [shape: bf16[128,128], index: 11, kind: input, shape index: {}]
  %s12 = inlined_call_operand.vmem [shape: f32[1,128], index: 12, kind: input, shape index: {}]
  %s13 = inlined_call_operand.hbm [shape: f32[64,384], index: 13, kind: output, shape index: {}]
  %s14 = sld [smem:[#allocation0]]
  $region168: #{tpu_custom_call.1} parent=0
    _
  %s16 = ssub.s32 1, %s14
  %s17 = scalar_select 0, %s16, %s14
  %s19 = sshll.u32 %s0, 4
  %s20 = int_to_ptr.vmem [resolvable:$true] %s19
  %22 = dma.vmem_to_smem %s20, 64, [#allocation8], [#allocation7]
  %s24 = sshll.u32 %s1, 4
  %s25 = int_to_ptr.hbm [resolvable:$true] %s24
  %27 = dma.hbm_to_smem %s25, 16, [#allocation9], [#allocation7]
  %29 = dma.done [#allocation7], 80
  %30 = sfence
  $region1: #{tpu_custom_call.1} parent=0
    #allocation10 [shape = 'u8[512]{0}', space=vmem, size = 0x400, scoped, tag = 'input window, operand 6, single buffered']
    #allocation11 [shape = 's32[2]{0}', space=sflag, size = 0x8, scoped, tag = 'scoped memory for tpu_custom_call.1']
    #allocation12 [shape = 's32[2]{0}', space=sflag, size = 0x8, scoped, tag = 'scoped memory for tpu_custom_call.1']
    #allocation13 [shape = 'u8[65536]{0}', space=vmem, size = 0x10000, scoped, tag = 'input window, operand 7, single buffered']
    #allocation14 [shape = 's32[1]{0}', space=sflag, size = 0x4, scoped, tag = 'scoped memory for tpu_custom_call.1']
    #allocation15 [shape = 'u8[32768]{0}', space=vmem, size = 0x8000, scoped, tag = 'input window, operand 9, single buffered']
    #allocation16 [shape = 'u8[32768]{0}', space=vmem, size = 0x8000, scoped, tag = 'input window, operand 11, single buffered']
    #allocation17 [shape = 's32[1]{0}', space=sflag, size = 0x4, scoped, tag = 'scoped memory for tpu_custom_call.1']
    #allocation18 [shape = 'u8[49152]{0}', space=vmem, size = 0xc000, scoped, tag = 'output window, operand 0']
    %31 = vsyncpa [#allocation11], 0
    %32 = vsyncpa [#allocation14], 0
    %33 = vsyncpa [#allocation17], 0
    %34 = vsyncpa [#allocation12], 0
    %s35 = scalar_lea.sflag [#allocation12], 1
    %36 = vsyncpa %s35, 0
    loop: start=0, step=1, limit=6
    $region2: #{tpu_custom_call.1} parent=1 // loop_pre_header
      _
    $region3: #{tpu_custom_call.1} parent=1 // loop_header
      %s38 = sphi 0, %s42
      %p39 = scmp.ge.s32.totalorder %s38, 6
      %s48 = sphi 0, %s50
      %s51 = sphi 0, %s48
      %s52 = sphi 0, %s51
      %s68 = sphi 0, %s52
      %s72 = sphi 0, %s72
      %s74 = sphi 0, %s72
      %s75 = sphi 0, %s74
      %s89 = sphi 0, %s75
      %s93 = sphi 0, %s93
      %s95 = sphi 0, %s93
      %s96 = sphi 0, %s95
      %s110 = sphi 0, %s96
      %s114 = sphi 0, %s114
      %s116 = sphi 0, %s114
      %s117 = sphi 0, %s116
      %s131 = sphi 0, %s117
      %s135 = sphi 0, %s135
      %s137 = sphi 0, %s135
      %s138 = sphi 0, %s137
      %s152 = sphi 0, %s138
      %s156 = sphi 0, %s156
      %s158 = sphi 0, %s156
      %s159 = sphi 0, %s158
      %s173 = sphi 0, %s159
      %s177 = sphi 0, %s177
      %s179 = sphi 0, %s177
      %s180 = sphi 0, %s179
      %s194 = sphi 0, %s180
      %s198 = sphi 0, %s198
      %s200 = sphi 0, %s198
      %s201 = sphi 0, %s200
      %s215 = sphi 0, %s201
      %s219 = sphi 0, %s219
      %s221 = sphi 0, %s219
      %s222 = sphi 0, %s221
      %s236 = sphi 0, %s222
      %s242 = sphi 0, %s244
      %s245 = sphi 0, %s242
      %s246 = sphi 0, %s245
      %s262 = sphi 0, %s246
    $region4: #{tpu_custom_call.1} parent=1 // loop_header_branch
      %41 = sbr.rel (%p39) target = $region8
    $region5: #{tpu_custom_call.1} parent=1 // loop_body
      %s43 = ssub.s32 %s38, 1
      %s44 = ssub.s32 %s38, 2
      %s45 = sadd.s32 %s38, 1
      %s46 = ssub.s32 %s38, %s45
      %p47 = scmp.eq.s32.totalorder %s46, 0
      %s49 = sadd.s32 %s48, 1
      %s50 = scalar_select %p47, %s48, %s49
      %p53 = pneg %p47
      %p54 = scmp.eq.s32.totalorder %s38, 3
      %p55 = por %p53, %p54
      %p56 = scmp.ne.s32.totalorder %s48, %s51
      %p57 = scmp.eq.s32.totalorder %s38, 0
      %p58 = por %p56, %p57
      %p59 = scmp.ne.s32.totalorder %s48, %s51
      %p60 = scmp.eq.s32.totalorder %s43, 3
      %p61 = por %p59, %p60
      %p62 = scmp.ne.s32.totalorder %s51, %s52
      %p63 = scmp.eq.s32.totalorder %s43, 0
      %p64 = por %p62, %p63
      %p65 = scmp.ne.s32.totalorder %s51, %s52
      %p66 = scmp.eq.s32.totalorder %s44, 3
      %p67 = por %p65, %p66
      %p69 = scmp.ne.s32.totalorder %s52, %s68
      %p70 = scmp.eq.s32.totalorder %s44, 0
      %p71 = por %p69, %p70
      %s73 = sadd.s32 %s72, 1
      %p76 = scmp.eq.s32.totalorder %s38, 3
      %p77 = scmp.ne.s32.totalorder %s72, %s74
      %p78 = scmp.eq.s32.totalorder %s38, 0
      %p79 = por %p77, %p78
      %p80 = scmp.ne.s32.totalorder %s72, %s74
      %p81 = scmp.eq.s32.totalorder %s43, 3
      %p82 = por %p80, %p81
      %p83 = scmp.ne.s32.totalorder %s74, %s75
      %p84 = scmp.eq.s32.totalorder %s43, 0
      %p85 = por %p83, %p84
      %p86 = scmp.ne.s32.totalorder %s74, %s75
      %p87 = scmp.eq.s32.totalorder %s44, 3
      %p88 = por %p86, %p87
      %p90 = scmp.ne.s32.totalorder %s75, %s89
      %p91 = scmp.eq.s32.totalorder %s44, 0
      %p92 = por %p90, %p91
      %s94 = sadd.s32 %s93, 1
      %p97 = scmp.eq.s32.totalorder %s38, 3
      %p98 = scmp.ne.s32.totalorder %s93, %s95
      %p99 = scmp.eq.s32.totalorder %s38, 0
      %p100 = por %p98, %p99
      %p101 = scmp.ne.s32.totalorder %s93, %s95
      %p102 = scmp.eq.s32.totalorder %s43, 3
      %p103 = por %p101, %p102
      %p104 = scmp.ne.s32.totalorder %s95, %s96
      %p105 = scmp.eq.s32.totalorder %s43, 0
      %p106 = por %p104, %p105
      %p107 = scmp.ne.s32.totalorder %s95, %s96
      %p108 = scmp.eq.s32.totalorder %s44, 3
      %p109 = por %p107, %p108
      %p111 = scmp.ne.s32.totalorder %s96, %s110
      %p112 = scmp.eq.s32.totalorder %s44, 0
      %p113 = por %p111, %p112
      %s115 = sadd.s32 %s114, 1
      %p118 = scmp.eq.s32.totalorder %s38, 3
      %p119 = scmp.ne.s32.totalorder %s114, %s116
      %p120 = scmp.eq.s32.totalorder %s38, 0
      %p121 = por %p119, %p120
      %p122 = scmp.ne.s32.totalorder %s114, %s116
      %p123 = scmp.eq.s32.totalorder %s43, 3
      %p124 = por %p122, %p123
      %p125 = scmp.ne.s32.totalorder %s116, %s117
      %p126 = scmp.eq.s32.totalorder %s43, 0
      %p127 = por %p125, %p126
      %p128 = scmp.ne.s32.totalorder %s116, %s117
      %p129 = scmp.eq.s32.totalorder %s44, 3
      %p130 = por %p128, %p129
      %p132 = scmp.ne.s32.totalorder %s117, %s131
      %p133 = scmp.eq.s32.totalorder %s44, 0
      %p134 = por %p132, %p133
      %s136 = sadd.s32 %s135, 1
      %p139 = scmp.eq.s32.totalorder %s38, 3
      %p140 = scmp.ne.s32.totalorder %s135, %s137
      %p141 = scmp.eq.s32.totalorder %s38, 0
      %p142 = por %p140, %p141
      %p143 = scmp.ne.s32.totalorder %s135, %s137
      %p144 = scmp.eq.s32.totalorder %s43, 3
      %p145 = por %p143, %p144
      %p146 = scmp.ne.s32.totalorder %s137, %s138
      %p147 = scmp.eq.s32.totalorder %s43, 0
      %p148 = por %p146, %p147
      %p149 = scmp.ne.s32.totalorder %s137, %s138
      %p150 = scmp.eq.s32.totalorder %s44, 3
      %p151 = por %p149, %p150
      %p153 = scmp.ne.s32.totalorder %s138, %s152
      %p154 = scmp.eq.s32.totalorder %s44, 0
      %p155 = por %p153, %p154
      %s157 = sadd.s32 %s156, 1
      %p160 = scmp.eq.s32.totalorder %s38, 3
      %p161 = scmp.ne.s32.totalorder %s156, %s158
      %p162 = scmp.eq.s32.totalorder %s38, 0
      %p163 = por %p161, %p162
      %p164 = scmp.ne.s32.totalorder %s156, %s158
      %p165 = scmp.eq.s32.totalorder %s43, 3
      %p166 = por %p164, %p165
      %p167 = scmp.ne.s32.totalorder %s158, %s159
      %p168 = scmp.eq.s32.totalorder %s43, 0
      %p169 = por %p167, %p168
      %p170 = scmp.ne.s32.totalorder %s158, %s159
      %p171 = scmp.eq.s32.totalorder %s44, 3
      %p172 = por %p170, %p171
      %p174 = scmp.ne.s32.totalorder %s159, %s173
      %p175 = scmp.eq.s32.totalorder %s44, 0
      %p176 = por %p174, %p175
      %s178 = sadd.s32 %s177, 1
      %p181 = scmp.eq.s32.totalorder %s38, 3
      %p182 = scmp.ne.s32.totalorder %s177, %s179
      %p183 = scmp.eq.s32.totalorder %s38, 0
      %p184 = por %p182, %p183
      %p185 = scmp.ne.s32.totalorder %s177, %s179
      %p186 = scmp.eq.s32.totalorder %s43, 3
      %p187 = por %p185, %p186
      %p188 = scmp.ne.s32.totalorder %s179, %s180
      %p189 = scmp.eq.s32.totalorder %s43, 0
      %p190 = por %p188, %p189
      %p191 = scmp.ne.s32.totalorder %s179, %s180
      %p192 = scmp.eq.s32.totalorder %s44, 3
      %p193 = por %p191, %p192
      %p195 = scmp.ne.s32.totalorder %s180, %s194
      %p196 = scmp.eq.s32.totalorder %s44, 0
      %p197 = por %p195, %p196
      %s199 = sadd.s32 %s198, 1
      %p202 = scmp.eq.s32.totalorder %s38, 3
      %p203 = scmp.ne.s32.totalorder %s198, %s200
      %p204 = scmp.eq.s32.totalorder %s38, 0
      %p205 = por %p203, %p204
      %p206 = scmp.ne.s32.totalorder %s198, %s200
      %p207 = scmp.eq.s32.totalorder %s43, 3
      %p208 = por %p206, %p207
      %p209 = scmp.ne.s32.totalorder %s200, %s201
      %p210 = scmp.eq.s32.totalorder %s43, 0
      %p211 = por %p209, %p210
      %p212 = scmp.ne.s32.totalorder %s200, %s201
      %p213 = scmp.eq.s32.totalorder %s44, 3
      %p214 = por %p212, %p213
      %p216 = scmp.ne.s32.totalorder %s201, %s215
      %p217 = scmp.eq.s32.totalorder %s44, 0
      %p218 = por %p216, %p217
      %s220 = sadd.s32 %s219, 1
      %p223 = scmp.eq.s32.totalorder %s38, 3
      %p224 = scmp.ne.s32.totalorder %s219, %s221
      %p225 = scmp.eq.s32.totalorder %s38, 0
      %p226 = por %p224, %p225
      %p227 = scmp.ne.s32.totalorder %s219, %s221
      %p228 = scmp.eq.s32.totalorder %s43, 3
      %p229 = por %p227, %p228
      %p230 = scmp.ne.s32.totalorder %s221, %s222
      %p231 = scmp.eq.s32.totalorder %s43, 0
      %p232 = por %p230, %p231
      %p233 = scmp.ne.s32.totalorder %s221, %s222
      %p234 = scmp.eq.s32.totalorder %s44, 3
      %p235 = por %p233, %p234
      %p237 = scmp.ne.s32.totalorder %s222, %s236
      %p238 = scmp.eq.s32.totalorder %s44, 0
      %p239 = por %p237, %p238
      %s240 = ssub.s32 %s38, %s45
      %p241 = scmp.eq.s32.totalorder %s240, 0
      %s243 = sadd.s32 %s242, 1
      %s244 = scalar_select %p241, %s242, %s243
      %p247 = pneg %p241
      %p248 = scmp.eq.s32.totalorder %s38, 3
      %p249 = por %p247, %p248
      %p250 = scmp.ne.s32.totalorder %s242, %s245
      %p251 = scmp.eq.s32.totalorder %s38, 0
      %p252 = por %p250, %p251
      %p253 = scmp.ne.s32.totalorder %s242, %s245
      %p254 = scmp.eq.s32.totalorder %s43, 3
      %p255 = por %p253, %p254
      %p256 = scmp.ne.s32.totalorder %s245, %s246
      %p257 = scmp.eq.s32.totalorder %s43, 0
      %p258 = por %p256, %p257
      %p259 = scmp.ne.s32.totalorder %s245, %s246
      %p260 = scmp.eq.s32.totalorder %s44, 3
      %p261 = por %p259, %p260
      %p263 = scmp.ne.s32.totalorder %s246, %s262
      %p264 = scmp.eq.s32.totalorder %s44, 0
      %p265 = por %p263, %p264
      %p266 = scmp.le.s32.totalorder 1, %s38
      %p267 = scmp.lt.s32.totalorder %s38, 5
      %p268 = pnand %p266, %p267
      %p269 = pneg %p268
      // Predicated region
      $region9: #{tpu_custom_call.1} parent=5 // pred_check
        _
      $region10: #{tpu_custom_call.1} parent=5 // pred_check_branch
        %271 = sbr.rel (%p268) target = $region12
      $region11: #{tpu_custom_call.1} parent=5 // pred_region
        %s272 = ssub.s32 %s38, 1
        // Predicated region
        $region13: #{tpu_custom_call.1} parent=11 // pred_check
          %p273 = pneg %p85
        $region14: #{tpu_custom_call.1} parent=11 // pred_check_branch
          %275 = sbr.rel (%p273) target = $region16
        $region15: #{tpu_custom_call.1} parent=11 // pred_region
          _
        $region16: #{tpu_custom_call.1} parent=11 // pred_fallthru
          _
        // Predicated region
        $region17: #{tpu_custom_call.1} parent=11 // pred_check
          %p276 = pneg %p106
        $region18: #{tpu_custom_call.1} parent=11 // pred_check_branch
          %278 = sbr.rel (%p276) target = $region20
        $region19: #{tpu_custom_call.1} parent=11 // pred_region
          %280 = vsyncadd [#allocation11], 0
          %s282 = sshll.u32 %s6, 4
          %s283 = int_to_ptr.hbm [resolvable:$true] %s282
          %s284 = sshll.u32 [#allocation10], 4
          %s285 = int_to_ptr.vmem [resolvable:$true] %s284
          %287 = dma.hbm_to_vmem [thread:$0]  %s283, 16, %s285, [#allocation11]
        $region20: #{tpu_custom_call.1} parent=11 // pred_fallthru
          _
        // Predicated region
        $region21: #{tpu_custom_call.1} parent=11 // pred_check
          %p288 = pneg %p127
        $region22: #{tpu_custom_call.1} parent=11 // pred_check_branch
          %290 = sbr.rel (%p288) target = $region24
        $region23: #{tpu_custom_call.1} parent=11 // pred_region
          %292 = vsyncadd [#allocation14], 0
          %s293 = sshll.u32 %s7, 4
          %s294 = int_to_ptr.hbm [resolvable:$true] %s293
          %s295 = sshll.u32 [#allocation13], 4
          %s296 = int_to_ptr.vmem [resolvable:$true] %s295
          %301 = dma.hbm_to_vmem [thread:$0]  %s294, 2048, %s296, [#allocation14], 128, 128, 8
        $region24: #{tpu_custom_call.1} parent=11 // pred_fallthru
          _
        // Predicated region
        $region25: #{tpu_custom_call.1} parent=11 // pred_check
          %p302 = pneg %p148
        $region26: #{tpu_custom_call.1} parent=11 // pred_check_branch
          %304 = sbr.rel (%p302) target = $region28
        $region27: #{tpu_custom_call.1} parent=11 // pred_region
          _
        $region28: #{tpu_custom_call.1} parent=11 // pred_fallthru
          _
        // Predicated region
        $region29: #{tpu_custom_call.1} parent=11 // pred_check
          %p305 = pneg %p169
        $region30: #{tpu_custom_call.1} parent=11 // pred_check_branch
          %307 = sbr.rel (%p305) target = $region32
        $region31: #{tpu_custom_call.1} parent=11 // pred_region
          %309 = vsyncadd [#allocation14], 0
          %s310 = sshll.u32 %s9, 4
          %s311 = int_to_ptr.hbm [resolvable:$true] %s310
          %s312 = sshll.u32 [#allocation15], 4
          %s313 = int_to_ptr.vmem [resolvable:$true] %s312
          %318 = dma.hbm_to_vmem [thread:$0]  %s311, 1024, %s313, [#allocation14], 64, 64, 4
        $region32: #{tpu_custom_call.1} parent=11 // pred_fallthru
          _
        // Predicated region
        $region33: #{tpu_custom_call.1} parent=11 // pred_check
          %p319 = pneg %p190
        $region34: #{tpu_custom_call.1} parent=11 // pred_check_branch
          %321 = sbr.rel (%p319) target = $region36
        $region35: #{tpu_custom_call.1} parent=11 // pred_region
          _
        $region36: #{tpu_custom_call.1} parent=11 // pred_fallthru
          _
        // Predicated region
        $region37: #{tpu_custom_call.1} parent=11 // pred_check
          %p322 = pneg %p211
        $region38: #{tpu_custom_call.1} parent=11 // pred_check_branch
          %324 = sbr.rel (%p322) target = $region40
        $region39: #{tpu_custom_call.1} parent=11 // pred_region
          %326 = vsyncadd [#allocation17], 0
          %s327 = sshll.u32 %s11, 4
          %s328 = int_to_ptr.hbm [resolvable:$true] %s327
          %s329 = sshll.u32 [#allocation16], 4
          %s330 = int_to_ptr.vmem [resolvable:$true] %s329
          %335 = dma.hbm_to_vmem [thread:$0]  %s328, 1024, %s330, [#allocation17], 64, 64, 4
        $region40: #{tpu_custom_call.1} parent=11 // pred_fallthru
          _
        // Predicated region
        $region41: #{tpu_custom_call.1} parent=11 // pred_check
          %p336 = pneg %p232
        $region42: #{tpu_custom_call.1} parent=11 // pred_check_branch
          %338 = sbr.rel (%p336) target = $region44
        $region43: #{tpu_custom_call.1} parent=11 // pred_region
          _
        $region44: #{tpu_custom_call.1} parent=11 // pred_fallthru
          _
      $region12: #{tpu_custom_call.1} parent=5 // pred_fallthru
        _
      %p339 = scmp.lt.s32.totalorder %s38, 4
      // Predicated region
      $region45: #{tpu_custom_call.1} parent=5 // pred_check
        %p340 = pneg %p339
      $region46: #{tpu_custom_call.1} parent=5 // pred_check_branch
        %342 = sbr.rel (%p340) target = $region48
      $region47: #{tpu_custom_call.1} parent=5 // pred_region
        // Predicated region
        $region49: #{tpu_custom_call.1} parent=47 // pred_check
          %p343 = pneg %p58
        $region50: #{tpu_custom_call.1} parent=47 // pred_check_branch
          %345 = sbr.rel (%p343) target = $region52
        $region51: #{tpu_custom_call.1} parent=47 // pred_region
          %s346 = smul.u32 2, %s38
          %p347 = scmp.lt.s32.totalorder %s346, 7
          %s348 = scalar_select %p347, %s346, 7
          %s349 = smul.addr %s348, 8
          %s350 = scalar_lea.vmem %s2, %s349
          %s351 = smul.u32 2, %s38
        $region52: #{tpu_custom_call.1} parent=47 // pred_fallthru
          _
      $region48: #{tpu_custom_call.1} parent=5 // pred_fallthru
        _
      %p352 = scmp.le.s32.totalorder 1, %s38
      %p353 = scmp.lt.s32.totalorder %s38, 5
      %p354 = pnand %p352, %p353
      %p355 = pneg %p354
      // Predicated region
      $region53: #{tpu_custom_call.1} parent=5 // pred_check
        _
      $region54: #{tpu_custom_call.1} parent=5 // pred_check_branch
        %357 = sbr.rel (%p354) target = $region56
      $region55: #{tpu_custom_call.1} parent=5 // pred_region
        %s358 = ssub.s32 %s38, 1
        // Predicated region
        $region57: #{tpu_custom_call.1} parent=55 // pred_check
          %p359 = pneg %p106
        $region58: #{tpu_custom_call.1} parent=55 // pred_check_branch
          %361 = sbr.rel (%p359) target = $region60
        $region59: #{tpu_custom_call.1} parent=55 // pred_region
          %363 = dma.done [#allocation11], 16
        $region60: #{tpu_custom_call.1} parent=55 // pred_fallthru
          _
        // Predicated region
        $region61: #{tpu_custom_call.1} parent=55 // pred_check
          %p364 = pneg %p127
        $region62: #{tpu_custom_call.1} parent=55 // pred_check_branch
          %366 = sbr.rel (%p364) target = $region64
        $region63: #{tpu_custom_call.1} parent=55 // pred_region
          %368 = dma.done [#allocation14], 2048
        $region64: #{tpu_custom_call.1} parent=55 // pred_fallthru
          _
        // Predicated region
        $region65: #{tpu_custom_call.1} parent=55 // pred_check
          %p369 = pneg %p169
        $region66: #{tpu_custom_call.1} parent=55 // pred_check_branch
          %371 = sbr.rel (%p369) target = $region68
        $region67: #{tpu_custom_call.1} parent=55 // pred_region
          %373 = dma.done [#allocation14], 1024
        $region68: #{tpu_custom_call.1} parent=55 // pred_fallthru
          _
        // Predicated region
        $region69: #{tpu_custom_call.1} parent=55 // pred_check
          %p374 = pneg %p211
        $region70: #{tpu_custom_call.1} parent=55 // pred_check_branch
          %376 = sbr.rel (%p374) target = $region72
        $region71: #{tpu_custom_call.1} parent=55 // pred_region
          %378 = dma.done [#allocation17], 1024
        $region72: #{tpu_custom_call.1} parent=55 // pred_fallthru
          _
        %s379 = smul.u32 2, %s43
        %p380 = scmp.lt.s32.totalorder %s379, 7
        %s381 = scalar_select %p380, %s379, 7
        %s382 = smul.addr %s381, 8
        %s383 = scalar_lea.vmem %s2, %s382
        %p384 = pneg %p64
        %p385 = pneg %p61
        %p386 = pneg %p85
        %p387 = pneg %p82
        %p388 = pneg %p106
        %p389 = pneg %p103
        %p390 = pneg %p127
        %p391 = pneg %p124
        %p392 = pneg %p148
        %p393 = pneg %p145
        %p394 = pneg %p169
        %p395 = pneg %p166
        %p396 = pneg %p190
        %p397 = pneg %p187
        %p398 = pneg %p211
        %p399 = pneg %p208
        %p400 = pneg %p232
        %p401 = pneg %p229
        %p402 = pneg %p258
        %p403 = pneg %p255
        %s404 = sand.u32 %s245, 1
        %s405 = scalar_lea.sflag [#allocation12], %s404
        %s406 = sand.u32 %s245, 1
        %s407 = smul.addr %s406, 48
        %s408 = scalar_lea.vmem [#allocation18], %s407
        %s409 = smul.u32 2, %s43
        %p410 = scmp.lt.s32.totalorder %s409, 7
        %s411 = scalar_select %p410, %s409, 7
        %s412 = smul.addr %s411, 8
        %s413 = scalar_lea.vmem %s2, %s412
        %s414 = smul.u32 2, %s43
        %s415 = smul.u32 2, %s43
        %s416 = smul.u32 %s43, 16
        %s417 = smul.u32 %s43, 128
        %s418 = sld [smem:[#allocation8 + %s417]]
        %s419 = scalar_lea.hbm %s3, %s418
        // Predicated region
        $region73: #{tpu_custom_call.1} parent=55 // pred_check
          _
        $region74: #{tpu_custom_call.1} parent=55 // pred_check_branch
          %421 = sbr.rel target = $region76
        $region75: #{tpu_custom_call.1} parent=55 // pred_region
          %422 = sst [smem:[#allocation21]] [#allocation20]
          %423 = sst [smem:[#allocation22]] [#allocation19]
        $region76: #{tpu_custom_call.1} parent=55 // pred_fallthru
          _
        %425 = shalt.err (0)
        %s427 = sshll.u32 %s419, 4
        %s428 = int_to_ptr.hbm [resolvable:$true] %s427
        %s429 = sshll.u32 [#allocation2], 4
        %s430 = int_to_ptr.vmem [resolvable:$true] %s429
        %432 = dma.hbm_to_vmem [thread:$0]  %s428, 16, %s430, [#allocation4]
        %s433 = sadd.s32 %s417, 1
        %s434 = sld [smem:[#allocation8 + %s433]]
        %s435 = scalar_lea.hbm %s3, %s434
        %s436 = scalar_lea.vmem [#allocation2], 1
        %s437 = scalar_lea.sflag [#allocation4], 1
        // Predicated region
        $region77: #{tpu_custom_call.1} parent=55 // pred_check
          _
        $region78: #{tpu_custom_call.1} parent=55 // pred_check_branch
          %439 = sbr.rel target = $region80
        $region79: #{tpu_custom_call.1} parent=55 // pred_region
          %440 = sst [smem:[#allocation21]] [#allocation24]
          %441 = sst [smem:[#allocation22]] [#allocation23]
        $region80: #{tpu_custom_call.1} parent=55 // pred_fallthru
          _
        %443 = shalt.err (0)
        %s445 = sshll.u32 %s435, 4
        %s446 = int_to_ptr.hbm [resolvable:$true] %s445
        %s447 = sshll.u32 %s436, 4
        %s448 = int_to_ptr.vmem [resolvable:$true] %s447
        %450 = dma.hbm_to_vmem [thread:$0]  %s446, 16, %s448, %s437
        %s451 = sadd.s32 %s417, 2
        %s452 = sld [smem:[#allocation8 + %s451]]
        %s453 = scalar_lea.hbm %s3, %s452
        %s454 = scalar_lea.vmem [#allocation2], 2
        %s455 = scalar_lea.sflag [#allocation4], 2
        // Predicated region
        $region81: #{tpu_custom_call.1} parent=55 // pred_check
          _
        $region82: #{tpu_custom_call.1} parent=55 // pred_check_branch
          %457 = sbr.rel target = $region84
        $region83: #{tpu_custom_call.1} parent=55 // pred_region
          %458 = sst [smem:[#allocation21]] [#allocation26]
          %459 = sst [smem:[#allocation22]] [#allocation25]
        $region84: #{tpu_custom_call.1} parent=55 // pred_fallthru
          _
        %461 = shalt.err (0)
        %s463 = sshll.u32 %s453, 4
        %s464 = int_to_ptr.hbm [resolvable:$true] %s463
        %s465 = sshll.u32 %s454, 4
        %s466 = int_to_ptr.vmem [resolvable:$true] %s465
        %468 = dma.hbm_to_vmem [thread:$0]  %s464, 16, %s466, %s455
        %s469 = sadd.s32 %s417, 3
        %s470 = sld [smem:[#allocation8 + %s469]]
        %s471 = scalar_lea.hbm %s3, %s470
        %s472 = scalar_lea.vmem [#allocation2], 3
        %s473 = scalar_lea.sflag [#allocation4], 3
        // Predicated region
        $region85: #{tpu_custom_call.1} parent=55 // pred_check
          _
        $region86: #{tpu_custom_call.1} parent=55 // pred_check_branch
          %475 = sbr.rel target = $region88
        $region87: #{tpu_custom_call.1} parent=55 // pred_region
          %476 = sst [smem:[#allocation21]] [#allocation28]
          %477 = sst [smem:[#allocation22]] [#allocation27]
        $region88: #{tpu_custom_call.1} parent=55 // pred_fallthru
          _
        %479 = shalt.err (0)
        %s481 = sshll.u32 %s471, 4
        %s482 = int_to_ptr.hbm [resolvable:$true] %s481
        %s483 = sshll.u32 %s472, 4
        %s484 = int_to_ptr.vmem [resolvable:$true] %s483
        %486 = dma.hbm_to_vmem [thread:$0]  %s482, 16, %s484, %s473
        %s487 = sadd.s32 %s417, 4
        %s488 = sld [smem:[#allocation8 + %s487]]
        %s489 = scalar_lea.hbm %s3, %s488
        %s490 = scalar_lea.vmem [#allocation2], 4
        %s491 = scalar_lea.sflag [#allocation4], 4
        // Predicated region
        $region89: #{tpu_custom_call.1} parent=55 // pred_check
          _
        $region90: #{tpu_custom_call.1} parent=55 // pred_check_branch
          %493 = sbr.rel target = $region92
        $region91: #{tpu_custom_call.1} parent=55 // pred_region
          %494 = sst [smem:[#allocation21]] [#allocation30]
          %495 = sst [smem:[#allocation22]] [#allocation29]
        $region92: #{tpu_custom_call.1} parent=55 // pred_fallthru
          _
        %497 = shalt.err (0)
        %s499 = sshll.u32 %s489, 4
        %s500 = int_to_ptr.hbm [resolvable:$true] %s499
        %s501 = sshll.u32 %s490, 4
        %s502 = int_to_ptr.vmem [resolvable:$true] %s501
        %504 = dma.hbm_to_vmem [thread:$0]  %s500, 16, %s502, %s491
        %s505 = sadd.s32 %s417, 5
        %s506 = sld [smem:[#allocation8 + %s505]]
        %s507 = scalar_lea.hbm %s3, %s506
        %s508 = scalar_lea.vmem [#allocation2], 5
        %s509 = scalar_lea.sflag [#allocation4], 5
        // Predicated region
        $region93: #{tpu_custom_call.1} parent=55 // pred_check
          _
        $region94: #{tpu_custom_call.1} parent=55 // pred_check_branch
          %511 = sbr.rel target = $region96
        $region95: #{tpu_custom_call.1} parent=55 // pred_region
          %512 = sst [smem:[#allocation21]] [#allocation32]
          %513 = sst [smem:[#allocation22]] [#allocation31]
        $region96: #{tpu_custom_call.1} parent=55 // pred_fallthru
          _
        %515 = shalt.err (0)
        %s517 = sshll.u32 %s507, 4
        %s518 = int_to_ptr.hbm [resolvable:$true] %s517
        %s519 = sshll.u32 %s508, 4
        %s520 = int_to_ptr.vmem [resolvable:$true] %s519
        %522 = dma.hbm_to_vmem [thread:$0]  %s518, 16, %s520, %s509
        %s523 = sadd.s32 %s417, 6
        %s524 = sld [smem:[#allocation8 + %s523]]
        %s525 = scalar_lea.hbm %s3, %s524
        %s526 = scalar_lea.vmem [#allocation2], 6
        %s527 = scalar_lea.sflag [#allocation4], 6
        // Predicated region
        $region97: #{tpu_custom_call.1} parent=55 // pred_check
          _
        $region98: #{tpu_custom_call.1} parent=55 // pred_check_branch
          %529 = sbr.rel target = $region100
        $region99: #{tpu_custom_call.1} parent=55 // pred_region
          %530 = sst [smem:[#allocation21]] [#allocation34]
          %531 = sst [smem:[#allocation22]] [#allocation33]
        $region100: #{tpu_custom_call.1} parent=55 // pred_fallthru
          _
        %533 = shalt.err (0)
        %s535 = sshll.u32 %s525, 4
        %s536 = int_to_ptr.hbm [resolvable:$true] %s535
        %s537 = sshll.u32 %s526, 4
        %s538 = int_to_ptr.vmem [resolvable:$true] %s537
        %540 = dma.hbm_to_vmem [thread:$0]  %s536, 16, %s538, %s527
        %s541 = sadd.s32 %s417, 7
        %s542 = sld [smem:[#allocation8 + %s541]]
        %s543 = scalar_lea.hbm %s3, %s542
        %s544 = scalar_lea.vmem [#allocation2], 7
        %s545 = scalar_lea.sflag [#allocation4], 7
        // Predicated region
        $region101: #{tpu_custom_call.1} parent=55 // pred_check
          _
        $region102: #{tpu_custom_call.1} parent=55 // pred_check_branch
          %547 = sbr.rel target = $region104
        $region103: #{tpu_custom_call.1} parent=55 // pred_region
          %548 = sst [smem:[#allocation21]] [#allocation36]
          %549 = sst [smem:[#allocation22]] [#allocation35]
        $region104: #{tpu_custom_call.1} parent=55 // pred_fallthru
          _
        %551 = shalt.err (0)
        %s553 = sshll.u32 %s543, 4
        %s554 = int_to_ptr.hbm [resolvable:$true] %s553
        %s555 = sshll.u32 %s544, 4
        %s556 = int_to_ptr.vmem [resolvable:$true] %s555
        %558 = dma.hbm_to_vmem [thread:$0]  %s554, 16, %s556, %s545
        %s559 = sld [smem:[#allocation9 + %s416]]
        %s560 = scalar_lea.hbm %s4, %s559
        %s561 = scalar_lea.sflag [#allocation4], 8
        // Predicated region
        $region105: #{tpu_custom_call.1} parent=55 // pred_check
          _
        $region106: #{tpu_custom_call.1} parent=55 // pred_check_branch
          %563 = sbr.rel target = $region108
        $region107: #{tpu_custom_call.1} parent=55 // pred_region
          %564 = sst [smem:[#allocation21]] [#allocation38]
          %565 = sst [smem:[#allocation22]] [#allocation37]
        $region108: #{tpu_custom_call.1} parent=55 // pred_fallthru
          _
        %567 = shalt.err (0)
        %s569 = sshll.u32 %s560, 4
        %s570 = int_to_ptr.hbm [resolvable:$true] %s569
        %s571 = sshll.u32 [#allocation3], 4
        %s572 = int_to_ptr.vmem [resolvable:$true] %s571
        %574 = dma.hbm_to_vmem [thread:$0]  %s570, 16, %s572, %s561
        loop: start=0, step=1, limit=16
        $region109: #{tpu_custom_call.1} parent=55 // loop_pre_header
          _
        $region110: #{tpu_custom_call.1} parent=55 // loop_header
          %s576 = sphi 0, %s580
          %p577 = scmp.ge.s32.totalorder %s576, 16
        $region111: #{tpu_custom_call.1} parent=55 // loop_header_branch
          %579 = sbr.rel (%p577) target = $region115
        $region112: #{tpu_custom_call.1} parent=55 // loop_body
          %s581 = sand.u32 %s576, 1
          %s582 = smul.u32 %s581, 9
          %s583 = scalar_lea.sflag [#allocation4], %s582
          %s584 = smul.u32 1, 1
          %s585 = sshll.u32 %s584, 4
          %586 = dma.done %s583, %s585
          %s587 = sadd.s32 1, %s582
          %s588 = scalar_lea.sflag [#allocation4], %s587
          %s589 = sshll.u32 %s584, 4
          %590 = dma.done %s588, %s589
          %s591 = sadd.s32 2, %s582
          %s592 = scalar_lea.sflag [#allocation4], %s591
          %s593 = sshll.u32 %s584, 4
          %594 = dma.done %s592, %s593
          %s595 = sadd.s32 3, %s582
          %s596 = scalar_lea.sflag [#allocation4], %s595
          %s597 = sshll.u32 %s584, 4
          %598 = dma.done %s596, %s597
          %s599 = sadd.s32 4, %s582
          %s600 = scalar_lea.sflag [#allocation4], %s599
          %s601 = sshll.u32 %s584, 4
          %602 = dma.done %s600, %s601
          %s603 = sadd.s32 5, %s582
          %s604 = scalar_lea.sflag [#allocation4], %s603
          %s605 = sshll.u32 %s584, 4
          %606 = dma.done %s604, %s605
          %s607 = sadd.s32 6, %s582
          %s608 = scalar_lea.sflag [#allocation4], %s607
          %s609 = sshll.u32 %s584, 4
          %610 = dma.done %s608, %s609
          %s611 = sadd.s32 7, %s582
          %s612 = scalar_lea.sflag [#allocation4], %s611
          %s613 = sshll.u32 %s584, 4
          %614 = dma.done %s612, %s613
          %s615 = scalar_lea.vmem [#allocation3], %s581
          %s616 = sadd.s32 8, %s582
          %s617 = scalar_lea.sflag [#allocation4], %s616
          %s618 = sshll.u32 %s584, 4
          %619 = dma.done %s617, %s618
          %s620 = sadd.s32 %s576, 1
          %p621 = scmp.lt.s32.totalorder %s620, 16
          // Predicated region
          $region116: #{tpu_custom_call.1} parent=112 // pred_check
            %p622 = pneg %p621
          $region117: #{tpu_custom_call.1} parent=112 // pred_check_branch
            %624 = sbr.rel (%p622) target = $region119
          $region118: #{tpu_custom_call.1} parent=112 // pred_region
            %s625 = ssub.s32 1, %s581
            %s626 = sadd.s32 %s416, %s620
            %s627 = smul.u32 %s626, 8
            %s628 = sld [smem:[#allocation8 + %s627]]
            %s629 = scalar_lea.hbm %s3, %s628
            %s630 = smul.u32 %s625, 8
            %s631 = scalar_lea.vmem [#allocation2], %s630
            %s632 = smul.u32 %s625, 9
            %s633 = scalar_lea.sflag [#allocation4], %s632
            // Predicated region
            $region120: #{tpu_custom_call.1} parent=118 // pred_check
              _
            $region121: #{tpu_custom_call.1} parent=118 // pred_check_branch
              %635 = sbr.rel target = $region123
            $region122: #{tpu_custom_call.1} parent=118 // pred_region
              %636 = sst [smem:[#allocation21]] [#allocation40]
              %637 = sst [smem:[#allocation22]] [#allocation39]
            $region123: #{tpu_custom_call.1} parent=118 // pred_fallthru
              _
            %639 = shalt.err (0)
            %s641 = sshll.u32 %s629, 4
            %s642 = int_to_ptr.hbm [resolvable:$true] %s641
            %s643 = sshll.u32 %s631, 4
            %s644 = int_to_ptr.vmem [resolvable:$true] %s643
            %646 = dma.hbm_to_vmem [thread:$0]  %s642, 16, %s644, %s633
            %s647 = sadd.s32 %s627, 1
            %s648 = sld [smem:[#allocation8 + %s647]]
            %s649 = scalar_lea.hbm %s3, %s648
            %s650 = sadd.s32 1, %s630
            %s651 = scalar_lea.vmem [#allocation2], %s650
            %s652 = sadd.s32 1, %s632
            %s653 = scalar_lea.sflag [#allocation4], %s652
            // Predicated region
            $region124: #{tpu_custom_call.1} parent=118 // pred_check
              _
            $region125: #{tpu_custom_call.1} parent=118 // pred_check_branch
              %655 = sbr.rel target = $region127
            $region126: #{tpu_custom_call.1} parent=118 // pred_region
              %656 = sst [smem:[#allocation21]] [#allocation42]
              %657 = sst [smem:[#allocation22]] [#allocation41]
            $region127: #{tpu_custom_call.1} parent=118 // pred_fallthru
              _
            %659 = shalt.err (0)
            %s661 = sshll.u32 %s649, 4
            %s662 = int_to_ptr.hbm [resolvable:$true] %s661
            %s663 = sshll.u32 %s651, 4
            %s664 = int_to_ptr.vmem [resolvable:$true] %s663
            %666 = dma.hbm_to_vmem [thread:$0]  %s662, 16, %s664, %s653
            %s667 = sadd.s32 %s627, 2
            %s668 = sld [smem:[#allocation8 + %s667]]
            %s669 = scalar_lea.hbm %s3, %s668
            %s670 = sadd.s32 2, %s630
            %s671 = scalar_lea.vmem [#allocation2], %s670
            %s672 = sadd.s32 2, %s632
            %s673 = scalar_lea.sflag [#allocation4], %s672
            // Predicated region
            $region128: #{tpu_custom_call.1} parent=118 // pred_check
              _
            $region129: #{tpu_custom_call.1} parent=118 // pred_check_branch
              %675 = sbr.rel target = $region131
            $region130: #{tpu_custom_call.1} parent=118 // pred_region
              %676 = sst [smem:[#allocation21]] [#allocation44]
              %677 = sst [smem:[#allocation22]] [#allocation43]
            $region131: #{tpu_custom_call.1} parent=118 // pred_fallthru
              _
            %679 = shalt.err (0)
            %s681 = sshll.u32 %s669, 4
            %s682 = int_to_ptr.hbm [resolvable:$true] %s681
            %s683 = sshll.u32 %s671, 4
            %s684 = int_to_ptr.vmem [resolvable:$true] %s683
            %686 = dma.hbm_to_vmem [thread:$0]  %s682, 16, %s684, %s673
            %s687 = sadd.s32 %s627, 3
            %s688 = sld [smem:[#allocation8 + %s687]]
            %s689 = scalar_lea.hbm %s3, %s688
            %s690 = sadd.s32 3, %s630
            %s691 = scalar_lea.vmem [#allocation2], %s690
            %s692 = sadd.s32 3, %s632
            %s693 = scalar_lea.sflag [#allocation4], %s692
            // Predicated region
            $region132: #{tpu_custom_call.1} parent=118 // pred_check
              _
            $region133: #{tpu_custom_call.1} parent=118 // pred_check_branch
              %695 = sbr.rel target = $region135
            $region134: #{tpu_custom_call.1} parent=118 // pred_region
              %696 = sst [smem:[#allocation21]] [#allocation46]
              %697 = sst [smem:[#allocation22]] [#allocation45]
            $region135: #{tpu_custom_call.1} parent=118 // pred_fallthru
              _
            %699 = shalt.err (0)
            %s701 = sshll.u32 %s689, 4
            %s702 = int_to_ptr.hbm [resolvable:$true] %s701
            %s703 = sshll.u32 %s691, 4
            %s704 = int_to_ptr.vmem [resolvable:$true] %s703
            %706 = dma.hbm_to_vmem [thread:$0]  %s702, 16, %s704, %s693
            %s707 = sadd.s32 %s627, 4
            %s708 = sld [smem:[#allocation8 + %s707]]
            %s709 = scalar_lea.hbm %s3, %s708
            %s710 = sadd.s32 4, %s630
            %s711 = scalar_lea.vmem [#allocation2], %s710
            %s712 = sadd.s32 4, %s632
            %s713 = scalar_lea.sflag [#allocation4], %s712
            // Predicated region
            $region136: #{tpu_custom_call.1} parent=118 // pred_check
              _
            $region137: #{tpu_custom_call.1} parent=118 // pred_check_branch
              %715 = sbr.rel target = $region139
            $region138: #{tpu_custom_call.1} parent=118 // pred_region
              %716 = sst [smem:[#allocation21]] [#allocation48]
              %717 = sst [smem:[#allocation22]] [#allocation47]
            $region139: #{tpu_custom_call.1} parent=118 // pred_fallthru
              _
            %719 = shalt.err (0)
            %s721 = sshll.u32 %s709, 4
            %s722 = int_to_ptr.hbm [resolvable:$true] %s721
            %s723 = sshll.u32 %s711, 4
            %s724 = int_to_ptr.vmem [resolvable:$true] %s723
            %726 = dma.hbm_to_vmem [thread:$0]  %s722, 16, %s724, %s713
            %s727 = sadd.s32 %s627, 5
            %s728 = sld [smem:[#allocation8 + %s727]]
            %s729 = scalar_lea.hbm %s3, %s728
            %s730 = sadd.s32 5, %s630
            %s731 = scalar_lea.vmem [#allocation2], %s730
            %s732 = sadd.s32 5, %s632
            %s733 = scalar_lea.sflag [#allocation4], %s732
            // Predicated region
            $region140: #{tpu_custom_call.1} parent=118 // pred_check
              _
            $region141: #{tpu_custom_call.1} parent=118 // pred_check_branch
              %735 = sbr.rel target = $region143
            $region142: #{tpu_custom_call.1} parent=118 // pred_region
              %736 = sst [smem:[#allocation21]] [#allocation50]
              %737 = sst [smem:[#allocation22]] [#allocation49]
            $region143: #{tpu_custom_call.1} parent=118 // pred_fallthru
              _
            %739 = shalt.err (0)
            %s741 = sshll.u32 %s729, 4
            %s742 = int_to_ptr.hbm [resolvable:$true] %s741
            %s743 = sshll.u32 %s731, 4
            %s744 = int_to_ptr.vmem [resolvable:$true] %s743
            %746 = dma.hbm_to_vmem [thread:$0]  %s742, 16, %s744, %s733
            %s747 = sadd.s32 %s627, 6
            %s748 = sld [smem:[#allocation8 + %s747]]
            %s749 = scalar_lea.hbm %s3, %s748
            %s750 = sadd.s32 6, %s630
            %s751 = scalar_lea.vmem [#allocation2], %s750
            %s752 = sadd.s32 6, %s632
            %s753 = scalar_lea.sflag [#allocation4], %s752
            // Predicated region
            $region144: #{tpu_custom_call.1} parent=118 // pred_check
              _
            $region145: #{tpu_custom_call.1} parent=118 // pred_check_branch
              %755 = sbr.rel target = $region147
            $region146: #{tpu_custom_call.1} parent=118 // pred_region
              %756 = sst [smem:[#allocation21]] [#allocation52]
              %757 = sst [smem:[#allocation22]] [#allocation51]
            $region147: #{tpu_custom_call.1} parent=118 // pred_fallthru
              _
            %759 = shalt.err (0)
            %s761 = sshll.u32 %s749, 4
            %s762 = int_to_ptr.hbm [resolvable:$true] %s761
            %s763 = sshll.u32 %s751, 4
            %s764 = int_to_ptr.vmem [resolvable:$true] %s763
            %766 = dma.hbm_to_vmem [thread:$0]  %s762, 16, %s764, %s753
            %s767 = sadd.s32 %s627, 7
            %s768 = sld [smem:[#allocation8 + %s767]]
            %s769 = scalar_lea.hbm %s3, %s768
            %s770 = sadd.s32 7, %s630
            %s771 = scalar_lea.vmem [#allocation2], %s770
            %s772 = sadd.s32 7, %s632
            %s773 = scalar_lea.sflag [#allocation4], %s772
            // Predicated region
            $region148: #{tpu_custom_call.1} parent=118 // pred_check
              _
            $region149: #{tpu_custom_call.1} parent=118 // pred_check_branch
              %775 = sbr.rel target = $region151
            $region150: #{tpu_custom_call.1} parent=118 // pred_region
              %776 = sst [smem:[#allocation21]] [#allocation54]
              %777 = sst [smem:[#allocation22]] [#allocation53]
            $region151: #{tpu_custom_call.1} parent=118 // pred_fallthru
              _
            %779 = shalt.err (0)
            %s781 = sshll.u32 %s769, 4
            %s782 = int_to_ptr.hbm [resolvable:$true] %s781
            %s783 = sshll.u32 %s771, 4
            %s784 = int_to_ptr.vmem [resolvable:$true] %s783
            %786 = dma.hbm_to_vmem [thread:$0]  %s782, 16, %s784, %s773
            %s787 = sld [smem:[#allocation9 + %s626]]
            %s788 = scalar_lea.hbm %s4, %s787
            %s789 = scalar_lea.vmem [#allocation3], %s625
            %s790 = sadd.s32 8, %s632
            %s791 = scalar_lea.sflag [#allocation4], %s790
            // Predicated region
            $region152: #{tpu_custom_call.1} parent=118 // pred_check
              _
            $region153: #{tpu_custom_call.1} parent=118 // pred_check_branch
              %793 = sbr.rel target = $region155
            $region154: #{tpu_custom_call.1} parent=118 // pred_region
              %794 = sst [smem:[#allocation21]] [#allocation56]
              %795 = sst [smem:[#allocation22]] [#allocation55]
            $region155: #{tpu_custom_call.1} parent=118 // pred_fallthru
              _
            %797 = shalt.err (0)
            %s799 = sshll.u32 %s788, 4
            %s800 = int_to_ptr.hbm [resolvable:$true] %s799
            %s801 = sshll.u32 %s789, 4
            %s802 = int_to_ptr.vmem [resolvable:$true] %s801
            %804 = dma.hbm_to_vmem [thread:$0]  %s800, 16, %s802, %s791
          $region119: #{tpu_custom_call.1} parent=112 // pred_fallthru
            _
          %s805 = smul.u32 %s581, 8
          %s806 = scalar_lea.vmem [#allocation2], %s805
          %v807 = vld [vmem:[%s806] sm:$0xff]
          %v808 = vrot.slane %v807, 4
          %v809 = vadd.f32 %v807, %v808
          %v810 = vrot.slane %v809, 2
          %v811 = vadd.f32 %v809, %v810
          %v812 = vrot.slane %v811, 1
          %v813 = vadd.f32 %v811, %v812
          %s814 = scalar_lea.vmem [#allocation5], %s576
          %815 = vst [vmem:[%s814] sm:$0x1] %v813
          %v816 = vld [vmem:[%s615] sm:$0x1]
          %s817 = scalar_lea.vmem [#allocation6], %s576
          %818 = vst [vmem:[%s817] sm:$0x1] %v816
        $region113: #{tpu_custom_call.1} parent=55 // loop_footer
          %s580 = sadd.s32 1, %s576
        $region114: #{tpu_custom_call.1} parent=55 // loop_footer_branch
          %575 = sbr.rel target = $region110
        $region115: #{tpu_custom_call.1} parent=55 // loop_exit
          _
        %v819 = vld [vmem:[#allocation5] sm:$0xff]
        %v820 = vld [vmem:[#allocation5 + $0x8] sm:$0xff]
        %v821 = vld [vmem:[%s413] sm:$0xff]
        %v822 = vld [vmem:[%s413 + $0x8] sm:$0xff]
        %824 = vset.pattern.permute.xlu0 0
        %825 = vperm.xlu0 %824, %v821
        %v826 = vpop.permute.xlu0 %825
        %829 = vset.pattern.permute.xlu0 0
        %830 = vperm.xlu0 %829, %v822
        %v831 = vpop.permute.xlu0 %830
        %v833 = vmul.f32 %v819, %v826
        %v834 = vmul.f32 %v820, %v831
        %v835 = vpack.c.bf16 %v834, %v833
        %v836 = vld [vmem:[%s5] sm:$0xf]
        %v837 = vld [vmem:[%s5 + $0x4] sm:$0xf]
        %v838 = vld [vmem:[%s5 + $0x8] sm:$0xf]
        %v839 = vld [vmem:[%s5 + $0xc] sm:$0xf]
        %v840 = vld [vmem:[%s5 + $0x10] sm:$0xf]
        %v841 = vld [vmem:[%s5 + $0x14] sm:$0xf]
        %v842 = vld [vmem:[%s5 + $0x18] sm:$0xf]
        %v843 = vld [vmem:[%s5 + $0x1c] sm:$0xf]
        %v844 = vld [vmem:[%s5 + $0x20] sm:$0xf]
        %v845 = vld [vmem:[%s5 + $0x24] sm:$0xf]
        %v846 = vld [vmem:[%s5 + $0x28] sm:$0xf]
        %v847 = vld [vmem:[%s5 + $0x2c] sm:$0xf]
        %v848 = vld [vmem:[%s5 + $0x30] sm:$0xf]
        %v849 = vld [vmem:[%s5 + $0x34] sm:$0xf]
        %v850 = vld [vmem:[%s5 + $0x38] sm:$0xf]
        %v851 = vld [vmem:[%s5 + $0x3c] sm:$0xf]
        %v852 = vld [vmem:[#allocation10] sm:$0x1]
        %v854 = vperm.slane %v852, 0
        %v872 = vunpack.c.l.b16 %v836
        %v873 = vunpack.c.l.b16 %v837
        %v874 = vunpack.c.l.b16 %v838
        %v875 = vunpack.c.l.b16 %v839
        %v876 = vunpack.c.l.b16 %v840
        %v877 = vunpack.c.l.b16 %v841
        %v878 = vunpack.c.l.b16 %v842
        %v879 = vunpack.c.l.b16 %v843
        %v880 = vunpack.c.l.b16 %v844
        %v881 = vunpack.c.l.b16 %v845
        %v882 = vunpack.c.l.b16 %v846
        %v883 = vunpack.c.l.b16 %v847
        %v884 = vunpack.c.l.b16 %v848
        %v885 = vunpack.c.l.b16 %v849
        %v886 = vunpack.c.l.b16 %v850
        %v887 = vunpack.c.l.b16 %v851
        %v888 = vpack.c.b16 %v873, %v872
        %v889 = vpack.c.b16 %v875, %v874
        %v890 = vpack.c.b16 %v877, %v876
        %v891 = vpack.c.b16 %v879, %v878
        %v892 = vpack.c.b16 %v881, %v880
        %v893 = vpack.c.b16 %v883, %v882
        %v894 = vpack.c.b16 %v885, %v884
        %v895 = vpack.c.b16 %v887, %v886
        %904 = vmatpush.bf16.msra.mxu0 %v895
        %905 = vmatpush.bf16.msra.mxu0 %v894
        %906 = vmatpush.bf16.msra.mxu0 %v893
        %907 = vmatpush.bf16.msra.mxu0 %v892
        %908 = vmatpush.bf16.msra.mxu0 %v891
        %909 = vmatpush.bf16.msra.mxu0 %v890
        %910 = vmatpush.bf16.msra.mxu0 %v889
        %911 = vmatpush.bf16.msra.mxu0 %v888
        %912 = vmatmul.bf16.gmra.mxu0 %v835
        %v913 = vpop.f32.mrf.mxu0
        %v914 = vadd.f32 %v854, %v913
        %v915 = vpop.f32.mrf.mxu0
        %v916 = vadd.f32 %v854, %v915
        %917 = vdwg.mxu0
        %v918 = vtanh.pop %v914
        %v919 = vtanh.pop %v916
        %v920 = vpack.c.bf16 %v919, %v918
        %v921 = vld [vmem:[#allocation13] sm:$0xff]
        %v922 = vld [vmem:[#allocation13 + $0x8] sm:$0xff]
        %v923 = vld [vmem:[#allocation13 + $0x10] sm:$0xff]
        %v924 = vld [vmem:[#allocation13 + $0x18] sm:$0xff]
        %v925 = vld [vmem:[#allocation13 + $0x20] sm:$0xff]
        %v926 = vld [vmem:[#allocation13 + $0x28] sm:$0xff]
        %v927 = vld [vmem:[#allocation13 + $0x30] sm:$0xff]
        %v928 = vld [vmem:[#allocation13 + $0x38] sm:$0xff]
        %v929 = vld [vmem:[#allocation13 + $0x40] sm:$0xff]
        %v930 = vld [vmem:[#allocation13 + $0x48] sm:$0xff]
        %v931 = vld [vmem:[#allocation13 + $0x50] sm:$0xff]
        %v932 = vld [vmem:[#allocation13 + $0x58] sm:$0xff]
        %v933 = vld [vmem:[#allocation13 + $0x60] sm:$0xff]
        %v934 = vld [vmem:[#allocation13 + $0x68] sm:$0xff]
        %v935 = vld [vmem:[#allocation13 + $0x70] sm:$0xff]
        %v936 = vld [vmem:[#allocation13 + $0x78] sm:$0xff]
        %v937 = vld [vmem:[%s8] sm:$0x3]
        %v939 = vperm.slane %v937, 0
        %v940 = vperm.slane %v937, 1
        %v959 = vunpack.c.l.b16 %v921
        %v960 = vunpack.c.h.b16 %v921
        %v961 = vunpack.c.l.b16 %v922
        %v962 = vunpack.c.h.b16 %v922
        %v963 = vunpack.c.l.b16 %v923
        %v964 = vunpack.c.h.b16 %v923
        %v965 = vunpack.c.l.b16 %v924
        %v966 = vunpack.c.h.b16 %v924
        %v967 = vunpack.c.l.b16 %v925
        %v968 = vunpack.c.h.b16 %v925
        %v969 = vunpack.c.l.b16 %v926
        %v970 = vunpack.c.h.b16 %v926
        %v971 = vunpack.c.l.b16 %v927
        %v972 = vunpack.c.h.b16 %v927
        %v973 = vunpack.c.l.b16 %v928
        %v974 = vunpack.c.h.b16 %v928
        %v975 = vunpack.c.l.b16 %v929
        %v976 = vunpack.c.h.b16 %v929
        %v977 = vunpack.c.l.b16 %v930
        %v978 = vunpack.c.h.b16 %v930
        %v979 = vunpack.c.l.b16 %v931
        %v980 = vunpack.c.h.b16 %v931
        %v981 = vunpack.c.l.b16 %v932
        %v982 = vunpack.c.h.b16 %v932
        %v983 = vunpack.c.l.b16 %v933
        %v984 = vunpack.c.h.b16 %v933
        %v985 = vunpack.c.l.b16 %v934
        %v986 = vunpack.c.h.b16 %v934
        %v987 = vunpack.c.l.b16 %v935
        %v988 = vunpack.c.h.b16 %v935
        %v989 = vunpack.c.l.b16 %v936
        %v990 = vunpack.c.h.b16 %v936
        %v991 = vpack.c.b16 %v961, %v959
        %v992 = vpack.c.b16 %v962, %v960
        %v993 = vpack.c.b16 %v965, %v963
        %v994 = vpack.c.b16 %v966, %v964
        %v995 = vpack.c.b16 %v969, %v967
        %v996 = vpack.c.b16 %v970, %v968
        %v997 = vpack.c.b16 %v973, %v971
        %v998 = vpack.c.b16 %v974, %v972
        %v999 = vpack.c.b16 %v977, %v975
        %v1000 = vpack.c.b16 %v978, %v976
        %v1001 = vpack.c.b16 %v981, %v979
        %v1002 = vpack.c.b16 %v982, %v980
        %v1003 = vpack.c.b16 %v985, %v983
        %v1004 = vpack.c.b16 %v986, %v984
        %v1005 = vpack.c.b16 %v989, %v987
        %v1006 = vpack.c.b16 %v990, %v988
        %1023 = vmatpush.bf16.msra.mxu0 %v1005
        %1024 = vmatpush.bf16.msra.mxu0 %v1003
        %1025 = vmatpush.bf16.msra.mxu0 %v1001
        %1026 = vmatpush.bf16.msra.mxu0 %v999
        %1027 = vmatpush.bf16.msra.mxu0 %v997
        %1028 = vmatpush.bf16.msra.mxu0 %v995
        %1029 = vmatpush.bf16.msra.mxu0 %v993
        %1030 = vmatpush.bf16.msra.mxu0 %v991
        %1031 = vmatmul.bf16.gmra.mxu0 %v920
        %v1032 = vpop.f32.mrf.mxu0
        %v1033 = vadd.f32 %v939, %v1032
        %v1034 = vpop.f32.mrf.mxu0
        %v1035 = vadd.f32 %v939, %v1034
        %1036 = vdwg.mxu0
        %1037 = vmatpush.bf16.msra.mxu0 %v1006
        %1038 = vmatpush.bf16.msra.mxu0 %v1004
        %1039 = vmatpush.bf16.msra.mxu0 %v1002
        %1040 = vmatpush.bf16.msra.mxu0 %v1000
        %1041 = vmatpush.bf16.msra.mxu0 %v998
        %1042 = vmatpush.bf16.msra.mxu0 %v996
        %1043 = vmatpush.bf16.msra.mxu0 %v994
        %1044 = vmatpush.bf16.msra.mxu0 %v992
        %1045 = vmatmul.bf16.gmra.mxu0 %v920
        %v1046 = vpop.f32.mrf.mxu0
        %v1047 = vadd.f32 %v940, %v1046
        %v1048 = vpop.f32.mrf.mxu0
        %v1049 = vadd.f32 %v940, %v1048
        %1050 = vdwg.mxu0
        %v1051 = vpack.c.bf16 %v1035, %v1033
        %v1052 = vld [vmem:[#allocation15] sm:$0xf]
        %v1053 = vld [vmem:[#allocation15 + $0x4] sm:$0xf]
        %v1054 = vld [vmem:[#allocation15 + $0x8] sm:$0xf]
        %v1055 = vld [vmem:[#allocation15 + $0xc] sm:$0xf]
        %v1056 = vld [vmem:[#allocation15 + $0x10] sm:$0xf]
        %v1057 = vld [vmem:[#allocation15 + $0x14] sm:$0xf]
        %v1058 = vld [vmem:[#allocation15 + $0x18] sm:$0xf]
        %v1059 = vld [vmem:[#allocation15 + $0x1c] sm:$0xf]
        %v1060 = vld [vmem:[#allocation15 + $0x20] sm:$0xf]
        %v1061 = vld [vmem:[#allocation15 + $0x24] sm:$0xf]
        %v1062 = vld [vmem:[#allocation15 + $0x28] sm:$0xf]
        %v1063 = vld [vmem:[#allocation15 + $0x2c] sm:$0xf]
        %v1064 = vld [vmem:[#allocation15 + $0x30] sm:$0xf]
        %v1065 = vld [vmem:[#allocation15 + $0x34] sm:$0xf]
        %v1066 = vld [vmem:[#allocation15 + $0x38] sm:$0xf]
        %v1067 = vld [vmem:[#allocation15 + $0x3c] sm:$0xf]
        %v1068 = vld [vmem:[%s10] sm:$0x1]
        %v1070 = vperm.slane %v1068, 0
        %v1088 = vunpack.c.l.b16 %v1052
        %v1089 = vunpack.c.l.b16 %v1053
        %v1090 = vunpack.c.l.b16 %v1054
        %v1091 = vunpack.c.l.b16 %v1055
        %v1092 = vunpack.c.l.b16 %v1056
        %v1093 = vunpack.c.l.b16 %v1057
        %v1094 = vunpack.c.l.b16 %v1058
        %v1095 = vunpack.c.l.b16 %v1059
        %v1096 = vunpack.c.l.b16 %v1060
        %v1097 = vunpack.c.l.b16 %v1061
        %v1098 = vunpack.c.l.b16 %v1062
        %v1099 = vunpack.c.l.b16 %v1063
        %v1100 = vunpack.c.l.b16 %v1064
        %v1101 = vunpack.c.l.b16 %v1065
        %v1102 = vunpack.c.l.b16 %v1066
        %v1103 = vunpack.c.l.b16 %v1067
        %v1104 = vpack.c.b16 %v1089, %v1088
        %v1105 = vpack.c.b16 %v1091, %v1090
        %v1106 = vpack.c.b16 %v1093, %v1092
        %v1107 = vpack.c.b16 %v1095, %v1094
        %v1108 = vpack.c.b16 %v1097, %v1096
        %v1109 = vpack.c.b16 %v1099, %v1098
        %v1110 = vpack.c.b16 %v1101, %v1100
        %v1111 = vpack.c.b16 %v1103, %v1102
        %1120 = vmatpush.bf16.msra.mxu0 %v1111
        %1121 = vmatpush.bf16.msra.mxu0 %v1110
        %1122 = vmatpush.bf16.msra.mxu0 %v1109
        %1123 = vmatpush.bf16.msra.mxu0 %v1108
        %1124 = vmatpush.bf16.msra.mxu0 %v1107
        %1125 = vmatpush.bf16.msra.mxu0 %v1106
        %1126 = vmatpush.bf16.msra.mxu0 %v1105
        %1127 = vmatpush.bf16.msra.mxu0 %v1104
        %1128 = vmatmul.bf16.gmra.mxu0 %v1051
        %v1129 = vpop.f32.mrf.mxu0
        %v1130 = vadd.f32 %v1070, %v1129
        %v1131 = vpop.f32.mrf.mxu0
        %v1132 = vadd.f32 %v1070, %v1131
        %1133 = vdwg.mxu0
        %v1134 = vtanh.pop %v1130
        %v1135 = vtanh.pop %v1132
        %v1136 = vpack.c.bf16 %v1135, %v1134
        %v1137 = vld [vmem:[#allocation16] sm:$0xf]
        %v1138 = vld [vmem:[#allocation16 + $0x4] sm:$0xf]
        %v1139 = vld [vmem:[#allocation16 + $0x8] sm:$0xf]
        %v1140 = vld [vmem:[#allocation16 + $0xc] sm:$0xf]
        %v1141 = vld [vmem:[#allocation16 + $0x10] sm:$0xf]
        %v1142 = vld [vmem:[#allocation16 + $0x14] sm:$0xf]
        %v1143 = vld [vmem:[#allocation16 + $0x18] sm:$0xf]
        %v1144 = vld [vmem:[#allocation16 + $0x1c] sm:$0xf]
        %v1145 = vld [vmem:[#allocation16 + $0x20] sm:$0xf]
        %v1146 = vld [vmem:[#allocation16 + $0x24] sm:$0xf]
        %v1147 = vld [vmem:[#allocation16 + $0x28] sm:$0xf]
        %v1148 = vld [vmem:[#allocation16 + $0x2c] sm:$0xf]
        %v1149 = vld [vmem:[#allocation16 + $0x30] sm:$0xf]
        %v1150 = vld [vmem:[#allocation16 + $0x34] sm:$0xf]
        %v1151 = vld [vmem:[#allocation16 + $0x38] sm:$0xf]
        %v1152 = vld [vmem:[#allocation16 + $0x3c] sm:$0xf]
        %v1153 = vld [vmem:[%s12] sm:$0x1]
        %v1155 = vperm.slane %v1153, 0
        %v1173 = vunpack.c.l.b16 %v1137
        %v1174 = vunpack.c.l.b16 %v1138
        %v1175 = vunpack.c.l.b16 %v1139
        %v1176 = vunpack.c.l.b16 %v1140
        %v1177 = vunpack.c.l.b16 %v1141
        %v1178 = vunpack.c.l.b16 %v1142
        %v1179 = vunpack.c.l.b16 %v1143
        %v1180 = vunpack.c.l.b16 %v1144
        %v1181 = vunpack.c.l.b16 %v1145
        %v1182 = vunpack.c.l.b16 %v1146
        %v1183 = vunpack.c.l.b16 %v1147
        %v1184 = vunpack.c.l.b16 %v1148
        %v1185 = vunpack.c.l.b16 %v1149
        %v1186 = vunpack.c.l.b16 %v1150
        %v1187 = vunpack.c.l.b16 %v1151
        %v1188 = vunpack.c.l.b16 %v1152
        %v1189 = vpack.c.b16 %v1174, %v1173
        %v1190 = vpack.c.b16 %v1176, %v1175
        %v1191 = vpack.c.b16 %v1178, %v1177
        %v1192 = vpack.c.b16 %v1180, %v1179
        %v1193 = vpack.c.b16 %v1182, %v1181
        %v1194 = vpack.c.b16 %v1184, %v1183
        %v1195 = vpack.c.b16 %v1186, %v1185
        %v1196 = vpack.c.b16 %v1188, %v1187
        %1205 = vmatpush.bf16.msra.mxu0 %v1196
        %1206 = vmatpush.bf16.msra.mxu0 %v1195
        %1207 = vmatpush.bf16.msra.mxu0 %v1194
        %1208 = vmatpush.bf16.msra.mxu0 %v1193
        %1209 = vmatpush.bf16.msra.mxu0 %v1192
        %1210 = vmatpush.bf16.msra.mxu0 %v1191
        %1211 = vmatpush.bf16.msra.mxu0 %v1190
        %1212 = vmatpush.bf16.msra.mxu0 %v1189
        %1213 = vmatmul.bf16.gmra.mxu0 %v1136
        %v1214 = vpop.f32.mrf.mxu0
        %v1215 = vadd.f32 %v1155, %v1214
        %v1216 = vpop.f32.mrf.mxu0
        %v1217 = vadd.f32 %v1155, %v1216
        %1218 = vdwg.mxu0
        %v1219 = vld [vmem:[#allocation6] sm:$0xff]
        %v1220 = vld [vmem:[#allocation6 + $0x8] sm:$0xff]
        %v1221 = vmul.f32 %v1215, %v1219
        %v1222 = vmul.f32 %v1217, %v1220
        %1223 = vadd.xlane.f32.xlu0 %v1221
        %v1224 = vpop.xlane.xlu0 %1223
        %1225 = vadd.xlane.f32.xlu0 %v1222
        %v1226 = vpop.xlane.xlu0 %1225
        %1227 = vst [vmem:[%s408] sm:$0xff] %v1033
        %1228 = vst [vmem:[%s408 + $0x8] sm:$0xff] %v1047
        %1229 = vst [vmem:[%s408 + $0x18] sm:$0xff] %v1035
        %1230 = vst [vmem:[%s408 + $0x20] sm:$0xff] %v1049
        %1231 = vst [vmem:[%s408 + $0x10] sm:$0xff] %v1224
        %1232 = vst [vmem:[%s408 + $0x28] sm:$0xff] %v1226
        %s1233 = sand.u32 %s245, 1
        %s1234 = scalar_lea.sflag [#allocation12], %s1233
        %s1235 = sand.u32 %s245, 1
        %s1236 = smul.addr %s1235, 48
        %s1237 = scalar_lea.vmem [#allocation18], %s1236
        // Predicated region
        $region156: #{tpu_custom_call.1} parent=55 // pred_check
          %p1238 = pneg %p255
        $region157: #{tpu_custom_call.1} parent=55 // pred_check_branch
          %1240 = sbr.rel (%p1238) target = $region159
        $region158: #{tpu_custom_call.1} parent=55 // pred_region
          %s1241 = smul.u32 2, %s43
          %1243 = vsyncadd %s1234, 0
          %s1244 = smul.addr %s1241, 3
          %s1245 = smul.addr %s1244, 8
          %s1246 = scalar_lea.hbm %s13, %s1245
          %s1247 = sshll.u32 %s1237, 4
          %s1248 = int_to_ptr.vmem [resolvable:$true] %s1247
          %s1249 = sshll.u32 %s1246, 4
          %s1250 = int_to_ptr.hbm [resolvable:$true] %s1249
          %1255 = dma.vmem_to_hbm [thread:$0]  %s1248, 768, %s1250, %s1234, 384, 384, 24
        $region159: #{tpu_custom_call.1} parent=55 // pred_fallthru
          _
      $region56: #{tpu_custom_call.1} parent=5 // pred_fallthru
        _
      %p1256 = scmp.le.s32.totalorder 2, %s38
      // Predicated region
      $region160: #{tpu_custom_call.1} parent=5 // pred_check
        %p1257 = pneg %p1256
      $region161: #{tpu_custom_call.1} parent=5 // pred_check_branch
        %1259 = sbr.rel (%p1257) target = $region163
      $region162: #{tpu_custom_call.1} parent=5 // pred_region
        %s1260 = ssub.s32 %s38, 2
        // Predicated region
        $region164: #{tpu_custom_call.1} parent=162 // pred_check
          %p1261 = pneg %p261
        $region165: #{tpu_custom_call.1} parent=162 // pred_check_branch
          %1263 = sbr.rel (%p1261) target = $region167
        $region166: #{tpu_custom_call.1} parent=162 // pred_region
          %s1264 = sand.u32 %s246, 1
          %s1265 = scalar_lea.sflag [#allocation12], %s1264
          %s1266 = sand.u32 %s246, 1
          %s1267 = smul.addr %s1266, 48
          %s1268 = scalar_lea.vmem [#allocation18], %s1267
          %1270 = dma.done %s1265, 768
        $region167: #{tpu_custom_call.1} parent=162 // pred_fallthru
          _
      $region163: #{tpu_custom_call.1} parent=5 // pred_fallthru
        _
    $region6: #{tpu_custom_call.1} parent=1 // loop_footer
      %s42 = sadd.s32 1, %s38
    $region7: #{tpu_custom_call.1} parent=1 // loop_footer_branch
      %37 = sbr.rel target = $region3
    $region8: #{tpu_custom_call.1} parent=1 // loop_exit
      _
    %1271 = vsyncpa [#allocation11], 1
    %s1272 = scalar_lea.sflag [#allocation11], 1
    %1273 = vsyncpa %s1272, 1
    %1274 = vsyncpa [#allocation14], 1
    %1275 = vsyncpa [#allocation17], 1
    %1276 = vsyncpa [#allocation12], 1
    %s1277 = scalar_lea.sflag [#allocation12], 1
    %1278 = vsyncpa %s1277, 1
  %1279 = vsyncmov [#allocation4]
  %s1280 = vpop.sfrf %1279
  %p1281 = scmp.eq.s32.totalorder %s1280, 0
  %p1282 = pneg %p1281
  %1284 = shalt.err (%p1282)
  %s1285 = scalar_lea.sflag [#allocation4], 1
  %1286 = vsyncmov %s1285
  %s1287 = vpop.sfrf %1286
  %p1288 = scmp.eq.s32.totalorder %s1287, 0
  %p1289 = pneg %p1288
  %1291 = shalt.err (%p1289)
  %s1292 = scalar_lea.sflag [#allocation4], 2
  %1293 = vsyncmov %s1292
  %s1294 = vpop.sfrf %1293
  %p1295 = scmp.eq.s32.totalorder %s1294, 0
  %p1296 = pneg %p1295
  %1298 = shalt.err (%p1296)
  %s1299 = scalar_lea.sflag [#allocation4], 3
  %1300 = vsyncmov %s1299
  %s1301 = vpop.sfrf %1300
  %p1302 = scmp.eq.s32.totalorder %s1301, 0
  %p1303 = pneg %p1302
  %1305 = shalt.err (%p1303)
  %s1306 = scalar_lea.sflag [#allocation4], 4
  %1307 = vsyncmov %s1306
  %s1308 = vpop.sfrf %1307
  %p1309 = scmp.eq.s32.totalorder %s1308, 0
  %p1310 = pneg %p1309
  %1312 = shalt.err (%p1310)
  %s1313 = scalar_lea.sflag [#allocation4], 5
  %1314 = vsyncmov %s1313
  %s1315 = vpop.sfrf %1314
  %p1316 = scmp.eq.s32.totalorder %s1315, 0
  %p1317 = pneg %p1316
  %1319 = shalt.err (%p1317)
  %s1320 = scalar_lea.sflag [#allocation4], 6
  %1321 = vsyncmov %s1320
  %s1322 = vpop.sfrf %1321
  %p1323 = scmp.eq.s32.totalorder %s1322, 0
  %p1324 = pneg %p1323
  %1326 = shalt.err (%p1324)
  %s1327 = scalar_lea.sflag [#allocation4], 7
  %1328 = vsyncmov %s1327
  %s1329 = vpop.sfrf %1328
  %p1330 = scmp.eq.s32.totalorder %s1329, 0
  %p1331 = pneg %p1330
  %1333 = shalt.err (%p1331)
  %s1334 = scalar_lea.sflag [#allocation4], 8
  %1335 = vsyncmov %s1334
  %s1336 = vpop.sfrf %1335
  %p1337 = scmp.eq.s32.totalorder %s1336, 0
  %p1338 = pneg %p1337
  %1340 = shalt.err (%p1338)
  %s1341 = scalar_lea.sflag [#allocation4], 9
  %1342 = vsyncmov %s1341
  %s1343 = vpop.sfrf %1342
  %p1344 = scmp.eq.s32.totalorder %s1343, 0
  %p1345 = pneg %p1344
  %1347 = shalt.err (%p1345)
  %s1348 = scalar_lea.sflag [#allocation4], 10
  %1349 = vsyncmov %s1348
  %s1350 = vpop.sfrf %1349
  %p1351 = scmp.eq.s32.totalorder %s1350, 0
  %p1352 = pneg %p1351
  %1354 = shalt.err (%p1352)
  %s1355 = scalar_lea.sflag [#allocation4], 11
  %1356 = vsyncmov %s1355
  %s1357 = vpop.sfrf %1356
  %p1358 = scmp.eq.s32.totalorder %s1357, 0
  %p1359 = pneg %p1358
  %1361 = shalt.err (%p1359)
  %s1362 = scalar_lea.sflag [#allocation4], 12
  %1363 = vsyncmov %s1362
  %s1364 = vpop.sfrf %1363
  %p1365 = scmp.eq.s32.totalorder %s1364, 0
  %p1366 = pneg %p1365
  %1368 = shalt.err (%p1366)
  %s1369 = scalar_lea.sflag [#allocation4], 13
  %1370 = vsyncmov %s1369
  %s1371 = vpop.sfrf %1370
  %p1372 = scmp.eq.s32.totalorder %s1371, 0
  %p1373 = pneg %p1372
  %1375 = shalt.err (%p1373)
  %s1376 = scalar_lea.sflag [#allocation4], 14
  %1377 = vsyncmov %s1376
  %s1378 = vpop.sfrf %1377
  %p1379 = scmp.eq.s32.totalorder %s1378, 0
  %p1380 = pneg %p1379
  %1382 = shalt.err (%p1380)
  %s1383 = scalar_lea.sflag [#allocation4], 15
  %1384 = vsyncmov %s1383
  %s1385 = vpop.sfrf %1384
  %p1386 = scmp.eq.s32.totalorder %s1385, 0
  %p1387 = pneg %p1386
  %1389 = shalt.err (%p1387)
  %s1390 = scalar_lea.sflag [#allocation4], 16
  %1391 = vsyncmov %s1390
  %s1392 = vpop.sfrf %1391
  %p1393 = scmp.eq.s32.totalorder %s1392, 0
  %p1394 = pneg %p1393
  %1396 = shalt.err (%p1394)
  %s1397 = scalar_lea.sflag [#allocation4], 17
  %1398 = vsyncmov %s1397
  %s1399 = vpop.sfrf %1398
  %p1400 = scmp.eq.s32.totalorder %s1399, 0
  %p1401 = pneg %p1400
  %1403 = shalt.err (%p1401)

</llo_original>
